<compile_context>
chip_gen: v7x
topology: tpu7x:2x2x1
jax: 0.10.0
libtpu: 0.0.40
codegen_flags: <defaults>
</compile_context>

<pallas_src>
import jax
import jax.numpy as jnp
import numpy as np
from jax import lax
from jax.experimental import pallas as pl
from jax.experimental.pallas import tpu as pltpu


# --------------------------------------------------------------------------
# Kernel 1 & 3: fully parallel (M, K) @ (K, N) + bias, tiled over rows.
# --------------------------------------------------------------------------
def _matmul_bias_kernel(x_ref, w_ref, b_ref, o_ref):
    o_ref[...] = (
        jnp.dot(x_ref[...], w_ref[...], preferred_element_type=jnp.float32)
        + b_ref[...]
    ).astype(o_ref.dtype)


def _matmul_bias(x, w, b, *, block_m=256, out_dtype=jnp.float32):
    """x: (M, K), w: (K, N), b: (1, N) -> (M, N).  Fully parallel over rows."""
    M, K = x.shape
    N = w.shape[1]
    tm = M if M <= block_m else block_m
    grid_m = pl.cdiv(M, tm)
    return pl.pallas_call(
        _matmul_bias_kernel,
        out_shape=jax.ShapeDtypeStruct((M, N), out_dtype),
        grid_spec=pltpu.PrefetchScalarGridSpec(
            num_scalar_prefetch=0,
            grid=(grid_m,),
            in_specs=[
                pl.BlockSpec((tm, K), lambda i: (i, 0)),   # row tile of x
                pl.BlockSpec((K, N), lambda i: (0, 0)),    # full weight
                pl.BlockSpec((1, N), lambda i: (0, 0)),    # bias
            ],
            out_specs=pl.BlockSpec((tm, N), lambda i: (i, 0)),
        ),
        compiler_params=pltpu.CompilerParams(
            dimension_semantics=("parallel",)),
    )(x, w, b)


# --------------------------------------------------------------------------
# Kernel 2: the LSTM recurrence.  Single invocation, whole time loop inside.
# --------------------------------------------------------------------------
def _lstm_recurrence_kernel(xproj_ref, whh_ref, hout_ref):
    """xproj_ref: (T, B, 4H) = x@W_ih^T + b (precomputed, bias folded in)
       whh_ref  : (H, 4H)
       hout_ref : (T, B, H)  -- all hidden states, consumed by fc kernel."""
    T, B, _ = xproj_ref.shape
    H = whh_ref.shape[0]

    # Hoist the (small) recurrent weight load out of the time loop.
    whh = whh_ref[...]                                    # (H, 4H)

    def step(t, carry):
        h_prev, c_prev = carry
        # Only the truly sequential matmul stays in the loop.
        gates = xproj_ref[t] + jnp.dot(
            h_prev, whh, preferred_element_type=jnp.float32)   # (B, 4H)

        # Gate order (i, f, g, o) matches torch.nn.LSTM.  With H a multiple
        # of 128 these slices are lane-tile aligned.
        i_g = jax.nn.sigmoid(gates[:, 0 * H:1 * H])
        f_g = jax.nn.sigmoid(gates[:, 1 * H:2 * H])
        g_g = jnp.tanh(gates[:, 2 * H:3 * H])
        o_g = jax.nn.sigmoid(gates[:, 3 * H:4 * H])

        c_new = f_g * c_prev + i_g * g_g
        h_new = o_g * jnp.tanh(c_new)

        hout_ref[t] = h_new.astype(hout_ref.dtype)
        return h_new, c_new

    h0 = jnp.zeros((B, H), jnp.float32)
    c0 = jnp.zeros((B, H), jnp.float32)
    lax.fori_loop(0, T, step, (h0, c0), unroll=True)


def _lstm_recurrence(x_proj, w_hh_t):
    """x_proj: (T, B, 4H) f32, w_hh_t: (H, 4H) -> h_all: (T, B, H) f32."""
    T, B, G4 = x_proj.shape
    H = w_hh_t.shape[0]
    return pl.pallas_call(
        _lstm_recurrence_kernel,
        out_shape=jax.ShapeDtypeStruct((T, B, H), jnp.float32),
        grid_spec=pltpu.PrefetchScalarGridSpec(
            num_scalar_prefetch=0,
            grid=(1,),                                   # single invocation
            in_specs=[
                pl.BlockSpec((T, B, G4), lambda i: (0, 0, 0)),  # x_proj
                pl.BlockSpec((H, G4), lambda i: (0, 0)),        # W_hh^T
            ],
            out_specs=pl.BlockSpec((T, B, H), lambda i: (0, 0, 0)),
        ),
        compiler_params=pltpu.CompilerParams(
            dimension_semantics=("arbitrary",)),          # sequential work
    )(x_proj, w_hh_t)


# --------------------------------------------------------------------------
# Forward pass
# --------------------------------------------------------------------------
@jax.jit
def decoder_rnn_forward(features, captions, params):
    """features: (B, E) f32, captions: (B, Tc) int32 -> logits (B, Tc, V)."""
    embed_w = params["embed"]          # (V, E)
    w_ih_t = params["w_ih_t"]          # (E, 4H)
    w_hh_t = params["w_hh_t"]          # (H, 4H)
    b_gate = params["b_gate"]          # (1, 4H)  == b_ih + b_hh
    w_fc_t = params["w_fc_t"]          # (H, V)
    b_fc = params["b_fc"]              # (1, V)

    B, E = features.shape
    H = w_hh_t.shape[0]
    V = w_fc_t.shape[1]

    # Glue (plain JAX): embedding gather + concat + to time-major.
    # TODO(synk): the embedding row-gather stays in XLA (data-dependent
    # gather; a DMA-gather kernel is not worthwhile at these sizes).
    embedded = jnp.take(embed_w, captions[:, :-1], axis=0)         # (B, Tc-1, E)
    x = jnp.concatenate([features[:, None, :], embedded], axis=1)  # (B, T, E)
    T = x.shape[1]
    x_tm = jnp.transpose(x, (1, 0, 2))                             # (T, B, E)

    # (1) hoisted input projection + folded gate bias, parallel over T*B rows.
    x_proj = _matmul_bias(x_tm.reshape(T * B, E), w_ih_t, b_gate)  # (T*B, 4H)
    x_proj = x_proj.reshape(T, B, 4 * H)

    # (2) sequential LSTM recurrence (only h @ W_hh^T inside the loop).
    h_all = _lstm_recurrence(x_proj, w_hh_t)                       # (T, B, H)

    # (3) hoisted vocab projection, parallel over T*B rows.
    logits = _matmul_bias(h_all.reshape(T * B, H), w_fc_t, b_fc)   # (T*B, V)
    return jnp.transpose(logits.reshape(T, B, V), (1, 0, 2))       # (B, T, V)


# --------------------------------------------------------------------------
# Parameter init (mirrors DecoderRNN.__init__) and pure-JAX reference.
# --------------------------------------------------------------------------
def _xavier_uniform(key, shape):
    fan_in, fan_out = shape[1], shape[0]
    limit = float(np.sqrt(6.0 / (fan_in + fan_out)))
    return jax.random.uniform(key, shape, jnp.float32, -limit, limit)


def init_params(key, embed_size, hidden_size, vocab_size):
    k_emb, k_ih, k_hh, k_bih, k_bhh, k_fc = jax.random.split(key, 6)
    E, H, V = embed_size, hidden_size, vocab_size
    s = 1.0 / float(np.sqrt(H))   # PyTorch LSTM default uniform bound

    embed = _xavier_uniform(k_emb, (V, E))                      # nn.Embedding
    w_ih = jax.random.uniform(k_ih, (4 * H, E), jnp.float32, -s, s)
    w_hh = jax.random.uniform(k_hh, (4 * H, H), jnp.float32, -s, s)
    b_ih = jax.random.uniform(k_bih, (4 * H,), jnp.float32, -s, s)
    b_hh = jax.random.uniform(k_bhh, (4 * H,), jnp.float32, -s, s)
    w_fc = _xavier_uniform(k_fc, (V, H))                        # fc_out weight
    b_fc = jnp.zeros((V,), jnp.float32)                         # fc_out bias

    return {
        "embed": embed,
        "w_ih_t": w_ih.T,                      # (E, 4H)
        "w_hh_t": w_hh.T,                      # (H, 4H)
        "b_gate": (b_ih + b_hh)[None, :],      # (1, 4H)
        "w_fc_t": w_fc.T,                      # (H, V)
        "b_fc": b_fc[None, :],                 # (1, V)
    }


def reference_forward(features, captions, params):
    """Pure-JAX reference (lax.scan LSTM) for correctness checking."""
    embedded = jnp.take(params["embed"], captions[:, :-1], axis=0)
    x = jnp.concatenate([features[:, None, :], embedded], axis=1)
    B = x.shape[0]
    H = params["w_hh_t"].shape[0]

    def step(carry, x_t):
        h, c = carry
        gates = x_t @ params["w_ih_t"] + h @ params["w_hh_t"] + params["b_gate"]
        i_g = jax.nn.sigmoid(gates[:, 0 * H:1 * H])
        f_g = jax.nn.sigmoid(gates[:, 1 * H:2 * H])
        g_g = jnp.tanh(gates[:, 2 * H:3 * H])
        o_g = jax.nn.sigmoid(gates[:, 3 * H:4 * H])
        c = f_g * c + i_g * g_g
        h = o_g * jnp.tanh(c)
        return (h, c), h

    init = (jnp.zeros((B, H), jnp.float32), jnp.zeros((B, H), jnp.float32))
    _, hs = lax.scan(step, init, jnp.transpose(x, (1, 0, 2)))
    hs = jnp.transpose(hs, (1, 0, 2))                          # (B, T, H)
    return hs @ params["w_fc_t"] + params["b_fc"]


if __name__ == "__main__":
    # Small, TPU-friendly shapes.  H is a multiple of 128 so gate slices are
    # lane-tile aligned; B is a multiple of 8 sublanes.
    B, T_CAP, E, H, V = 8, 8, 64, 128, 256

    key = jax.random.PRNGKey(0)
    k_params, k_feat, k_cap = jax.random.split(key, 3)

    params = init_params(k_params, embed_size=E, hidden_size=H, vocab_size=V)
    features = jax.random.normal(k_feat, (B, E), jnp.float32)
    captions = jax.random.randint(k_cap, (B, T_CAP), 0, V, jnp.int32)

    logits = decoder_rnn_forward(features, captions, params)
    jax.block_until_ready(logits)

    assert logits.shape == (B, T_CAP, V), logits.shape

    ref = reference_forward(features, captions, params)
    np.testing.assert_allclose(np.asarray(logits), np.asarray(ref),
                               rtol=2e-4, atol=2e-4)

    print("KERNEL_OK")
</pallas_src>

<mosaic_0001>
module attributes {stable_mosaic.version = 11 : i64} {
  func.func @_matmul_bias_kernel(%arg0: i32, %arg1: memref<64x64xf32, #tpu.memory_space<vmem>>, %arg2: memref<64x512xf32, #tpu.memory_space<vmem>>, %arg3: memref<1x512xf32, #tpu.memory_space<vmem>>, %arg4: memref<64x512xf32, #tpu.memory_space<vmem>>) attributes {dimension_semantics = [#tpu.dimension_semantics<parallel>], iteration_bounds = array<i64: 1>, scalar_prefetch = 0 : i64, scratch_operands = 0 : i64, tpu.core_type = #tpu.core_type<tc>, window_params = [{transform_indices = @transform_0, window_bounds = array<i64: 64, 64>}, {pipeline_mode = #tpu.pipeline_mode<synchronous>, transform_indices = @transform_1, window_bounds = array<i64: 64, 512>}, {pipeline_mode = #tpu.pipeline_mode<synchronous>, transform_indices = @transform_2, window_bounds = array<i64: 1, 512>}, {transform_indices = @transform_3, window_bounds = array<i64: 64, 512>}]} {
    %c0 = arith.constant 0 : index
    %c0_0 = arith.constant 0 : index
    %0 = vector.load %arg1[%c0, %c0_0] : memref<64x64xf32, #tpu.memory_space<vmem>>, vector<64x64xf32>
    %c0_1 = arith.constant 0 : index
    %c0_2 = arith.constant 0 : index
    %1 = vector.load %arg2[%c0_1, %c0_2] : memref<64x512xf32, #tpu.memory_space<vmem>>, vector<64x512xf32>
    %cst = arith.constant dense<0.000000e+00> : vector<64x512xf32>
    %2 = tpu.matmul %0, %1, %cst {dimension_numbers = #tpu.dot_dimension_numbers<[1], [0], [0], [1], [0, 0, 1, 1], [], []>} : vector<64x64xf32>, vector<64x512xf32>, vector<64x512xf32> -> vector<64x512xf32>
    %c0_3 = arith.constant 0 : index
    %c0_4 = arith.constant 0 : index
    %3 = vector.load %arg3[%c0_3, %c0_4] : memref<1x512xf32, #tpu.memory_space<vmem>>, vector<1x512xf32>
    %4 = vector.broadcast %3 : vector<1x512xf32> to vector<64x512xf32>
    %5 = arith.addf %2, %4 : vector<64x512xf32>
    %c0_5 = arith.constant 0 : index
    %c0_6 = arith.constant 0 : index
    %6 = vector.load %arg4[%c0_5, %c0_6] : memref<64x512xf32, #tpu.memory_space<vmem>>, vector<64x512xf32>
    tpu.vector_store %arg4[%c0_5, %c0_6], %5 {strides = array<i32>} : memref<64x512xf32, #tpu.memory_space<vmem>>, vector<64x512xf32>,
    return
  }
  func.func @transform_0(%arg0: i32) -> (i32, i32) {
    %c0_i32 = arith.constant 0 : i32
    %c0_i32_0 = arith.constant 0 : i32
    return %arg0, %c0_i32 : i32, i32
  }
  func.func @transform_1(%arg0: i32) -> (i32, i32) {
    %c0_i32 = arith.constant 0 : i32
    %c0_i32_0 = arith.constant 0 : i32
    %c0_i32_1 = arith.constant 0 : i32
    return %c0_i32, %c0_i32_0 : i32, i32
  }
  func.func @transform_2(%arg0: i32) -> (i32, i32) {
    %c0_i32 = arith.constant 0 : i32
    %c0_i32_0 = arith.constant 0 : i32
    %c0_i32_1 = arith.constant 0 : i32
    return %c0_i32, %c0_i32_0 : i32, i32
  }
  func.func @transform_3(%arg0: i32) -> (i32, i32) {
    %c0_i32 = arith.constant 0 : i32
    %c0_i32_0 = arith.constant 0 : i32
    return %arg0, %c0_i32 : i32, i32
  }
}

module attributes {stable_mosaic.version = 11 : i64} {
  func.func @_lstm_recurrence_kernel(%arg0: i32, %arg1: memref<8x8x512xf32, #tpu.memory_space<vmem>>, %arg2: memref<128x512xf32, #tpu.memory_space<vmem>>, %arg3: memref<8x8x128xf32, #tpu.memory_space<vmem>>) attributes {dimension_semantics = [#tpu.dimension_semantics<arbitrary>], iteration_bounds = array<i64: 1>, scalar_prefetch = 0 : i64, scratch_operands = 0 : i64, tpu.core_type = #tpu.core_type<tc>, window_params = [{pipeline_mode = #tpu.pipeline_mode<synchronous>, transform_indices = @transform_0, window_bounds = array<i64: 8, 8, 512>}, {pipeline_mode = #tpu.pipeline_mode<synchronous>, transform_indices = @transform_1, window_bounds = array<i64: 128, 512>}, {pipeline_mode = #tpu.pipeline_mode<synchronous>, transform_indices = @transform_2, window_bounds = array<i64: 8, 8, 128>}]} {
    %c0 = arith.constant 0 : index
    %c0_0 = arith.constant 0 : index
    %0 = vector.load %arg2[%c0, %c0_0] : memref<128x512xf32, #tpu.memory_space<vmem>>, vector<128x512xf32>
    %cst = arith.constant 0.000000e+00 : f32
    %1 = vector.broadcast %cst : f32 to vector<8x128xf32>
    %cst_1 = arith.constant 0.000000e+00 : f32
    %2 = vector.broadcast %cst_1 : f32 to vector<8x128xf32>
    %c0_i32 = arith.constant 0 : i32
    %3 = arith.index_cast %c0_i32 : i32 to index
    %c0_2 = arith.constant 0 : index
    %c0_3 = arith.constant 0 : index
    %4 = vector.load %arg1[%3, %c0_2, %c0_3] : memref<8x8x512xf32, #tpu.memory_space<vmem>>, vector<1x8x512xf32>
    %5 = vector.shape_cast %4 : vector<1x8x512xf32> to vector<8x512xf32>
    %cst_4 = arith.constant dense<0.000000e+00> : vector<8x512xf32>
    %6 = tpu.matmul %1, %0, %cst_4 {dimension_numbers = #tpu.dot_dimension_numbers<[1], [0], [0], [1], [0, 0, 1, 1], [], []>} : vector<8x128xf32>, vector<128x512xf32>, vector<8x512xf32> -> vector<8x512xf32>
    %7 = arith.addf %5, %6 : vector<8x512xf32>
    %8 = vector.extract_strided_slice %7 {offsets = [0, 0], sizes = [8, 128], strides = [1, 1]} : vector<8x512xf32> to vector<8x128xf32>
    %9 = arith.negf %8 : vector<8x128xf32>
    %10 = math.exp %9 : vector<8x128xf32>
    %cst_5 = arith.constant 1.000000e+00 : f32
    %11 = vector.broadcast %cst_5 : f32 to vector<8x128xf32>
    %12 = arith.addf %11, %10 : vector<8x128xf32>
    %13 = arith.divf %11, %12 : vector<8x128xf32>
    %14 = vector.extract_strided_slice %7 {offsets = [0, 128], sizes = [8, 128], strides = [1, 1]} : vector<8x512xf32> to vector<8x128xf32>
    %15 = arith.negf %14 : vector<8x128xf32>
    %16 = math.exp %15 : vector<8x128xf32>
    %cst_6 = arith.constant 1.000000e+00 : f32
    %17 = vector.broadcast %cst_6 : f32 to vector<8x128xf32>
    %18 = arith.addf %17, %16 : vector<8x128xf32>
    %19 = arith.divf %17, %18 : vector<8x128xf32>
    %20 = vector.extract_strided_slice %7 {offsets = [0, 256], sizes = [8, 128], strides = [1, 1]} : vector<8x512xf32> to vector<8x128xf32>
    %21 = math.tanh %20 : vector<8x128xf32>
    %22 = vector.extract_strided_slice %7 {offsets = [0, 384], sizes = [8, 128], strides = [1, 1]} : vector<8x512xf32> to vector<8x128xf32>
    %23 = arith.negf %22 : vector<8x128xf32>
    %24 = math.exp %23 : vector<8x128xf32>
    %cst_7 = arith.constant 1.000000e+00 : f32
    %25 = vector.broadcast %cst_7 : f32 to vector<8x128xf32>
    %26 = arith.addf %25, %24 : vector<8x128xf32>
    %27 = arith.divf %25, %26 : vector<8x128xf32>
    %28 = arith.mulf %19, %2 : vector<8x128xf32>
    %29 = arith.mulf %13, %21 : vector<8x128xf32>
    %30 = arith.addf %28, %29 : vector<8x128xf32>
    %31 = math.tanh %30 : vector<8x128xf32>
    %32 = arith.mulf %27, %31 : vector<8x128xf32>
    %33 = arith.index_cast %c0_i32 : i32 to index
    %c0_8 = arith.constant 0 : index
    %c0_9 = arith.constant 0 : index
    %34 = vector.load %arg3[%33, %c0_8, %c0_9] : memref<8x8x128xf32, #tpu.memory_space<vmem>>, vector<1x8x128xf32>
    %35 = vector.shape_cast %34 : vector<1x8x128xf32> to vector<8x128xf32>
    %36 = vector.shape_cast %32 : vector<8x128xf32> to vector<1x8x128xf32>
    tpu.vector_store %arg3[%33, %c0_8, %c0_9], %36 {strides = array<i32>} : memref<8x8x128xf32, #tpu.memory_space<vmem>>, vector<1x8x128xf32>,
    %c1_i32 = arith.constant 1 : i32
    %37 = arith.index_cast %c1_i32 : i32 to index
    %c0_10 = arith.constant 0 : index
    %c0_11 = arith.constant 0 : index
    %38 = vector.load %arg1[%37, %c0_10, %c0_11] : memref<8x8x512xf32, #tpu.memory_space<vmem>>, vector<1x8x512xf32>
    %39 = vector.shape_cast %38 : vector<1x8x512xf32> to vector<8x512xf32>
    %cst_12 = arith.constant dense<0.000000e+00> : vector<8x512xf32>
    %40 = tpu.matmul %32, %0, %cst_12 {dimension_numbers = #tpu.dot_dimension_numbers<[1], [0], [0], [1], [0, 0, 1, 1], [], []>} : vector<8x128xf32>, vector<128x512xf32>, vector<8x512xf32> -> vector<8x512xf32>
    %41 = arith.addf %39, %40 : vector<8x512xf32>
    %42 = vector.extract_strided_slice %41 {offsets = [0, 0], sizes = [8, 128], strides = [1, 1]} : vector<8x512xf32> to vector<8x128xf32>
    %43 = arith.negf %42 : vector<8x128xf32>
    %44 = math.exp %43 : vector<8x128xf32>
    %cst_13 = arith.constant 1.000000e+00 : f32
    %45 = vector.broadcast %cst_13 : f32 to vector<8x128xf32>
    %46 = arith.addf %45, %44 : vector<8x128xf32>
    %47 = arith.divf %45, %46 : vector<8x128xf32>
    %48 = vector.extract_strided_slice %41 {offsets = [0, 128], sizes = [8, 128], strides = [1, 1]} : vector<8x512xf32> to vector<8x128xf32>
    %49 = arith.negf %48 : vector<8x128xf32>
    %50 = math.exp %49 : vector<8x128xf32>
    %cst_14 = arith.constant 1.000000e+00 : f32
    %51 = vector.broadcast %cst_14 : f32 to vector<8x128xf32>
    %52 = arith.addf %51, %50 : vector<8x128xf32>
    %53 = arith.divf %51, %52 : vector<8x128xf32>
    %54 = vector.extract_strided_slice %41 {offsets = [0, 256], sizes = [8, 128], strides = [1, 1]} : vector<8x512xf32> to vector<8x128xf32>
    %55 = math.tanh %54 : vector<8x128xf32>
    %56 = vector.extract_strided_slice %41 {offsets = [0, 384], sizes = [8, 128], strides = [1, 1]} : vector<8x512xf32> to vector<8x128xf32>
    %57 = arith.negf %56 : vector<8x128xf32>
    %58 = math.exp %57 : vector<8x128xf32>
    %cst_15 = arith.constant 1.000000e+00 : f32
    %59 = vector.broadcast %cst_15 : f32 to vector<8x128xf32>
    %60 = arith.addf %59, %58 : vector<8x128xf32>
    %61 = arith.divf %59, %60 : vector<8x128xf32>
    %62 = arith.mulf %53, %30 : vector<8x128xf32>
    %63 = arith.mulf %47, %55 : vector<8x128xf32>
    %64 = arith.addf %62, %63 : vector<8x128xf32>
    %65 = math.tanh %64 : vector<8x128xf32>
    %66 = arith.mulf %61, %65 : vector<8x128xf32>
    %67 = arith.index_cast %c1_i32 : i32 to index
    %c0_16 = arith.constant 0 : index
    %c0_17 = arith.constant 0 : index
    %68 = vector.load %arg3[%67, %c0_16, %c0_17] : memref<8x8x128xf32, #tpu.memory_space<vmem>>, vector<1x8x128xf32>
    %69 = vector.shape_cast %68 : vector<1x8x128xf32> to vector<8x128xf32>
    %70 = vector.shape_cast %66 : vector<8x128xf32> to vector<1x8x128xf32>
    tpu.vector_store %arg3[%67, %c0_16, %c0_17], %70 {strides = array<i32>} : memref<8x8x128xf32, #tpu.memory_space<vmem>>, vector<1x8x128xf32>,
    %c2_i32 = arith.constant 2 : i32
    %71 = arith.index_cast %c2_i32 : i32 to index
    %c0_18 = arith.constant 0 : index
    %c0_19 = arith.constant 0 : index
    %72 = vector.load %arg1[%71, %c0_18, %c0_19] : memref<8x8x512xf32, #tpu.memory_space<vmem>>, vector<1x8x512xf32>
    %73 = vector.shape_cast %72 : vector<1x8x512xf32> to vector<8x512xf32>
    %cst_20 = arith.constant dense<0.000000e+00> : vector<8x512xf32>
    %74 = tpu.matmul %66, %0, %cst_20 {dimension_numbers = #tpu.dot_dimension_numbers<[1], [0], [0], [1], [0, 0, 1, 1], [], []>} : vector<8x128xf32>, vector<128x512xf32>, vector<8x512xf32> -> vector<8x512xf32>
    %75 = arith.addf %73, %74 : vector<8x512xf32>
    %76 = vector.extract_strided_slice %75 {offsets = [0, 0], sizes = [8, 128], strides = [1, 1]} : vector<8x512xf32> to vector<8x128xf32>
    %77 = arith.negf %76 : vector<8x128xf32>
    %78 = math.exp %77 : vector<8x128xf32>
    %cst_21 = arith.constant 1.000000e+00 : f32
    %79 = vector.broadcast %cst_21 : f32 to vector<8x128xf32>
    %80 = arith.addf %79, %78 : vector<8x128xf32>
    %81 = arith.divf %79, %80 : vector<8x128xf32>
    %82 = vector.extract_strided_slice %75 {offsets = [0, 128], sizes = [8, 128], strides = [1, 1]} : vector<8x512xf32> to vector<8x128xf32>
    %83 = arith.negf %82 : vector<8x128xf32>
    %84 = math.exp %83 : vector<8x128xf32>
    %cst_22 = arith.constant 1.000000e+00 : f32
    %85 = vector.broadcast %cst_22 : f32 to vector<8x128xf32>
    %86 = arith.addf %85, %84 : vector<8x128xf32>
    %87 = arith.divf %85, %86 : vector<8x128xf32>
    %88 = vector.extract_strided_slice %75 {offsets = [0, 256], sizes = [8, 128], strides = [1, 1]} : vector<8x512xf32> to vector<8x128xf32>
    %89 = math.tanh %88 : vector<8x128xf32>
    %90 = vector.extract_strided_slice %75 {offsets = [0, 384], sizes = [8, 128], strides = [1, 1]} : vector<8x512xf32> to vector<8x128xf32>
    %91 = arith.negf %90 : vector<8x128xf32>
    %92 = math.exp %91 : vector<8x128xf32>
    %cst_23 = arith.constant 1.000000e+00 : f32
    %93 = vector.broadcast %cst_23 : f32 to vector<8x128xf32>
    %94 = arith.addf %93, %92 : vector<8x128xf32>
    %95 = arith.divf %93, %94 : vector<8x128xf32>
    %96 = arith.mulf %87, %64 : vector<8x128xf32>
    %97 = arith.mulf %81, %89 : vector<8x128xf32>
    %98 = arith.addf %96, %97 : vector<8x128xf32>
    %99 = math.tanh %98 : vector<8x128xf32>
    %100 = arith.mulf %95, %99 : vector<8x128xf32>
    %101 = arith.index_cast %c2_i32 : i32 to index
    %c0_24 = arith.constant 0 : index
    %c0_25 = arith.constant 0 : index
    %102 = vector.load %arg3[%101, %c0_24, %c0_25] : memref<8x8x128xf32, #tpu.memory_space<vmem>>, vector<1x8x128xf32>
    %103 = vector.shape_cast %102 : vector<1x8x128xf32> to vector<8x128xf32>
    %104 = vector.shape_cast %100 : vector<8x128xf32> to vector<1x8x128xf32>
    tpu.vector_store %arg3[%101, %c0_24, %c0_25], %104 {strides = array<i32>} : memref<8x8x128xf32, #tpu.memory_space<vmem>>, vector<1x8x128xf32>,
    %c3_i32 = arith.constant 3 : i32
    %105 = arith.index_cast %c3_i32 : i32 to index
    %c0_26 = arith.constant 0 : index
    %c0_27 = arith.constant 0 : index
    %106 = vector.load %arg1[%105, %c0_26, %c0_27] : memref<8x8x512xf32, #tpu.memory_space<vmem>>, vector<1x8x512xf32>
    %107 = vector.shape_cast %106 : vector<1x8x512xf32> to vector<8x512xf32>
    %cst_28 = arith.constant dense<0.000000e+00> : vector<8x512xf32>
    %108 = tpu.matmul %100, %0, %cst_28 {dimension_numbers = #tpu.dot_dimension_numbers<[1], [0], [0], [1], [0, 0, 1, 1], [], []>} : vector<8x128xf32>, vector<128x512xf32>, vector<8x512xf32> -> vector<8x512xf32>
    %109 = arith.addf %107, %108 : vector<8x512xf32>
    %110 = vector.extract_strided_slice %109 {offsets = [0, 0], sizes = [8, 128], strides = [1, 1]} : vector<8x512xf32> to vector<8x128xf32>
    %111 = arith.negf %110 : vector<8x128xf32>
    %112 = math.exp %111 : vector<8x128xf32>
    %cst_29 = arith.constant 1.000000e+00 : f32
    %113 = vector.broadcast %cst_29 : f32 to vector<8x128xf32>
    %114 = arith.addf %113, %112 : vector<8x128xf32>
    %115 = arith.divf %113, %114 : vector<8x128xf32>
    %116 = vector.extract_strided_slice %109 {offsets = [0, 128], sizes = [8, 128], strides = [1, 1]} : vector<8x512xf32> to vector<8x128xf32>
    %117 = arith.negf %116 : vector<8x128xf32>
    %118 = math.exp %117 : vector<8x128xf32>
    %cst_30 = arith.constant 1.000000e+00 : f32
    %119 = vector.broadcast %cst_30 : f32 to vector<8x128xf32>
    %120 = arith.addf %119, %118 : vector<8x128xf32>
    %121 = arith.divf %119, %120 : vector<8x128xf32>
    %122 = vector.extract_strided_slice %109 {offsets = [0, 256], sizes = [8, 128], strides = [1, 1]} : vector<8x512xf32> to vector<8x128xf32>
    %123 = math.tanh %122 : vector<8x128xf32>
    %124 = vector.extract_strided_slice %109 {offsets = [0, 384], sizes = [8, 128], strides = [1, 1]} : vector<8x512xf32> to vector<8x128xf32>
    %125 = arith.negf %124 : vector<8x128xf32>
    %126 = math.exp %125 : vector<8x128xf32>
    %cst_31 = arith.constant 1.000000e+00 : f32
    %127 = vector.broadcast %cst_31 : f32 to vector<8x128xf32>
    %128 = arith.addf %127, %126 : vector<8x128xf32>
    %129 = arith.divf %127, %128 : vector<8x128xf32>
    %130 = arith.mulf %121, %98 : vector<8x128xf32>
    %131 = arith.mulf %115, %123 : vector<8x128xf32>
    %132 = arith.addf %130, %131 : vector<8x128xf32>
    %133 = math.tanh %132 : vector<8x128xf32>
    %134 = arith.mulf %129, %133 : vector<8x128xf32>
    %135 = arith.index_cast %c3_i32 : i32 to index
    %c0_32 = arith.constant 0 : index
    %c0_33 = arith.constant 0 : index
    %136 = vector.load %arg3[%135, %c0_32, %c0_33] : memref<8x8x128xf32, #tpu.memory_space<vmem>>, vector<1x8x128xf32>
    %137 = vector.shape_cast %136 : vector<1x8x128xf32> to vector<8x128xf32>
    %138 = vector.shape_cast %134 : vector<8x128xf32> to vector<1x8x128xf32>
    tpu.vector_store %arg3[%135, %c0_32, %c0_33], %138 {strides = array<i32>} : memref<8x8x128xf32, #tpu.memory_space<vmem>>, vector<1x8x128xf32>,
    %c4_i32 = arith.constant 4 : i32
    %139 = arith.index_cast %c4_i32 : i32 to index
    %c0_34 = arith.constant 0 : index
    %c0_35 = arith.constant 0 : index
    %140 = vector.load %arg1[%139, %c0_34, %c0_35] : memref<8x8x512xf32, #tpu.memory_space<vmem>>, vector<1x8x512xf32>
    %141 = vector.shape_cast %140 : vector<1x8x512xf32> to vector<8x512xf32>
    %cst_36 = arith.constant dense<0.000000e+00> : vector<8x512xf32>
    %142 = tpu.matmul %134, %0, %cst_36 {dimension_numbers = #tpu.dot_dimension_numbers<[1], [0], [0], [1], [0, 0, 1, 1], [], []>} : vector<8x128xf32>, vector<128x512xf32>, vector<8x512xf32> -> vector<8x512xf32>
    %143 = arith.addf %141, %142 : vector<8x512xf32>
    %144 = vector.extract_strided_slice %143 {offsets = [0, 0], sizes = [8, 128], strides = [1, 1]} : vector<8x512xf32> to vector<8x128xf32>
    %145 = arith.negf %144 : vector<8x128xf32>
    %146 = math.exp %145 : vector<8x128xf32>
    %cst_37 = arith.constant 1.000000e+00 : f32
    %147 = vector.broadcast %cst_37 : f32 to vector<8x128xf32>
    %148 = arith.addf %147, %146 : vector<8x128xf32>
    %149 = arith.divf %147, %148 : vector<8x128xf32>
    %150 = vector.extract_strided_slice %143 {offsets = [0, 128], sizes = [8, 128], strides = [1, 1]} : vector<8x512xf32> to vector<8x128xf32>
    %151 = arith.negf %150 : vector<8x128xf32>
    %152 = math.exp %151 : vector<8x128xf32>
    %cst_38 = arith.constant 1.000000e+00 : f32
    %153 = vector.broadcast %cst_38 : f32 to vector<8x128xf32>
    %154 = arith.addf %153, %152 : vector<8x128xf32>
    %155 = arith.divf %153, %154 : vector<8x128xf32>
    %156 = vector.extract_strided_slice %143 {offsets = [0, 256], sizes = [8, 128], strides = [1, 1]} : vector<8x512xf32> to vector<8x128xf32>
    %157 = math.tanh %156 : vector<8x128xf32>
    %158 = vector.extract_strided_slice %143 {offsets = [0, 384], sizes = [8, 128], strides = [1, 1]} : vector<8x512xf32> to vector<8x128xf32>
    %159 = arith.negf %158 : vector<8x128xf32>
    %160 = math.exp %159 : vector<8x128xf32>
    %cst_39 = arith.constant 1.000000e+00 : f32
    %161 = vector.broadcast %cst_39 : f32 to vector<8x128xf32>
    %162 = arith.addf %161, %160 : vector<8x128xf32>
    %163 = arith.divf %161, %162 : vector<8x128xf32>
    %164 = arith.mulf %155, %132 : vector<8x128xf32>
    %165 = arith.mulf %149, %157 : vector<8x128xf32>
    %166 = arith.addf %164, %165 : vector<8x128xf32>
    %167 = math.tanh %166 : vector<8x128xf32>
    %168 = arith.mulf %163, %167 : vector<8x128xf32>
    %169 = arith.index_cast %c4_i32 : i32 to index
    %c0_40 = arith.constant 0 : index
    %c0_41 = arith.constant 0 : index
    %170 = vector.load %arg3[%169, %c0_40, %c0_41] : memref<8x8x128xf32, #tpu.memory_space<vmem>>, vector<1x8x128xf32>
    %171 = vector.shape_cast %170 : vector<1x8x128xf32> to vector<8x128xf32>
    %172 = vector.shape_cast %168 : vector<8x128xf32> to vector<1x8x128xf32>
    tpu.vector_store %arg3[%169, %c0_40, %c0_41], %172 {strides = array<i32>} : memref<8x8x128xf32, #tpu.memory_space<vmem>>, vector<1x8x128xf32>,
    %c5_i32 = arith.constant 5 : i32
    %173 = arith.index_cast %c5_i32 : i32 to index
    %c0_42 = arith.constant 0 : index
    %c0_43 = arith.constant 0 : index
    %174 = vector.load %arg1[%173, %c0_42, %c0_43] : memref<8x8x512xf32, #tpu.memory_space<vmem>>, vector<1x8x512xf32>
    %175 = vector.shape_cast %174 : vector<1x8x512xf32> to vector<8x512xf32>
    %cst_44 = arith.constant dense<0.000000e+00> : vector<8x512xf32>
    %176 = tpu.matmul %168, %0, %cst_44 {dimension_numbers = #tpu.dot_dimension_numbers<[1], [0], [0], [1], [0, 0, 1, 1], [], []>} : vector<8x128xf32>, vector<128x512xf32>, vector<8x512xf32> -> vector<8x512xf32>
    %177 = arith.addf %175, %176 : vector<8x512xf32>
    %178 = vector.extract_strided_slice %177 {offsets = [0, 0], sizes = [8, 128], strides = [1, 1]} : vector<8x512xf32> to vector<8x128xf32>
    %179 = arith.negf %178 : vector<8x128xf32>
    %180 = math.exp %179 : vector<8x128xf32>
    %cst_45 = arith.constant 1.000000e+00 : f32
    %181 = vector.broadcast %cst_45 : f32 to vector<8x128xf32>
    %182 = arith.addf %181, %180 : vector<8x128xf32>
    %183 = arith.divf %181, %182 : vector<8x128xf32>
    %184 = vector.extract_strided_slice %177 {offsets = [0, 128], sizes = [8, 128], strides = [1, 1]} : vector<8x512xf32> to vector<8x128xf32>
    %185 = arith.negf %184 : vector<8x128xf32>
    %186 = math.exp %185 : vector<8x128xf32>
    %cst_46 = arith.constant 1.000000e+00 : f32
    %187 = vector.broadcast %cst_46 : f32 to vector<8x128xf32>
    %188 = arith.addf %187, %186 : vector<8x128xf32>
    %189 = arith.divf %187, %188 : vector<8x128xf32>
    %190 = vector.extract_strided_slice %177 {offsets = [0, 256], sizes = [8, 128], strides = [1, 1]} : vector<8x512xf32> to vector<8x128xf32>
    %191 = math.tanh %190 : vector<8x128xf32>
    %192 = vector.extract_strided_slice %177 {offsets = [0, 384], sizes = [8, 128], strides = [1, 1]} : vector<8x512xf32> to vector<8x128xf32>
    %193 = arith.negf %192 : vector<8x128xf32>
    %194 = math.exp %193 : vector<8x128xf32>
    %cst_47 = arith.constant 1.000000e+00 : f32
    %195 = vector.broadcast %cst_47 : f32 to vector<8x128xf32>
    %196 = arith.addf %195, %194 : vector<8x128xf32>
    %197 = arith.divf %195, %196 : vector<8x128xf32>
    %198 = arith.mulf %189, %166 : vector<8x128xf32>
    %199 = arith.mulf %183, %191 : vector<8x128xf32>
    %200 = arith.addf %198, %199 : vector<8x128xf32>
    %201 = math.tanh %200 : vector<8x128xf32>
    %202 = arith.mulf %197, %201 : vector<8x128xf32>
    %203 = arith.index_cast %c5_i32 : i32 to index
    %c0_48 = arith.constant 0 : index
    %c0_49 = arith.constant 0 : index
    %204 = vector.load %arg3[%203, %c0_48, %c0_49] : memref<8x8x128xf32, #tpu.memory_space<vmem>>, vector<1x8x128xf32>
    %205 = vector.shape_cast %204 : vector<1x8x128xf32> to vector<8x128xf32>
    %206 = vector.shape_cast %202 : vector<8x128xf32> to vector<1x8x128xf32>
    tpu.vector_store %arg3[%203, %c0_48, %c0_49], %206 {strides = array<i32>} : memref<8x8x128xf32, #tpu.memory_space<vmem>>, vector<1x8x128xf32>,
    %c6_i32 = arith.constant 6 : i32
    %207 = arith.index_cast %c6_i32 : i32 to index
    %c0_50 = arith.constant 0 : index
    %c0_51 = arith.constant 0 : index
    %208 = vector.load %arg1[%207, %c0_50, %c0_51] : memref<8x8x512xf32, #tpu.memory_space<vmem>>, vector<1x8x512xf32>
    %209 = vector.shape_cast %208 : vector<1x8x512xf32> to vector<8x512xf32>
    %cst_52 = arith.constant dense<0.000000e+00> : vector<8x512xf32>
    %210 = tpu.matmul %202, %0, %cst_52 {dimension_numbers = #tpu.dot_dimension_numbers<[1], [0], [0], [1], [0, 0, 1, 1], [], []>} : vector<8x128xf32>, vector<128x512xf32>, vector<8x512xf32> -> vector<8x512xf32>
    %211 = arith.addf %209, %210 : vector<8x512xf32>
    %212 = vector.extract_strided_slice %211 {offsets = [0, 0], sizes = [8, 128], strides = [1, 1]} : vector<8x512xf32> to vector<8x128xf32>
    %213 = arith.negf %212 : vector<8x128xf32>
    %214 = math.exp %213 : vector<8x128xf32>
    %cst_53 = arith.constant 1.000000e+00 : f32
    %215 = vector.broadcast %cst_53 : f32 to vector<8x128xf32>
    %216 = arith.addf %215, %214 : vector<8x128xf32>
    %217 = arith.divf %215, %216 : vector<8x128xf32>
    %218 = vector.extract_strided_slice %211 {offsets = [0, 128], sizes = [8, 128], strides = [1, 1]} : vector<8x512xf32> to vector<8x128xf32>
    %219 = arith.negf %218 : vector<8x128xf32>
    %220 = math.exp %219 : vector<8x128xf32>
    %cst_54 = arith.constant 1.000000e+00 : f32
    %221 = vector.broadcast %cst_54 : f32 to vector<8x128xf32>
    %222 = arith.addf %221, %220 : vector<8x128xf32>
    %223 = arith.divf %221, %222 : vector<8x128xf32>
    %224 = vector.extract_strided_slice %211 {offsets = [0, 256], sizes = [8, 128], strides = [1, 1]} : vector<8x512xf32> to vector<8x128xf32>
    %225 = math.tanh %224 : vector<8x128xf32>
    %226 = vector.extract_strided_slice %211 {offsets = [0, 384], sizes = [8, 128], strides = [1, 1]} : vector<8x512xf32> to vector<8x128xf32>
    %227 = arith.negf %226 : vector<8x128xf32>
    %228 = math.exp %227 : vector<8x128xf32>
    %cst_55 = arith.constant 1.000000e+00 : f32
    %229 = vector.broadcast %cst_55 : f32 to vector<8x128xf32>
    %230 = arith.addf %229, %228 : vector<8x128xf32>
    %231 = arith.divf %229, %230 : vector<8x128xf32>
    %232 = arith.mulf %223, %200 : vector<8x128xf32>
    %233 = arith.mulf %217, %225 : vector<8x128xf32>
    %234 = arith.addf %232, %233 : vector<8x128xf32>
    %235 = math.tanh %234 : vector<8x128xf32>
    %236 = arith.mulf %231, %235 : vector<8x128xf32>
    %237 = arith.index_cast %c6_i32 : i32 to index
    %c0_56 = arith.constant 0 : index
    %c0_57 = arith.constant 0 : index
    %238 = vector.load %arg3[%237, %c0_56, %c0_57] : memref<8x8x128xf32, #tpu.memory_space<vmem>>, vector<1x8x128xf32>
    %239 = vector.shape_cast %238 : vector<1x8x128xf32> to vector<8x128xf32>
    %240 = vector.shape_cast %236 : vector<8x128xf32> to vector<1x8x128xf32>
    tpu.vector_store %arg3[%237, %c0_56, %c0_57], %240 {strides = array<i32>} : memref<8x8x128xf32, #tpu.memory_space<vmem>>, vector<1x8x128xf32>,
    %c7_i32 = arith.constant 7 : i32
    %241 = arith.index_cast %c7_i32 : i32 to index
    %c0_58 = arith.constant 0 : index
    %c0_59 = arith.constant 0 : index
    %242 = vector.load %arg1[%241, %c0_58, %c0_59] : memref<8x8x512xf32, #tpu.memory_space<vmem>>, vector<1x8x512xf32>
    %243 = vector.shape_cast %242 : vector<1x8x512xf32> to vector<8x512xf32>
    %cst_60 = arith.constant dense<0.000000e+00> : vector<8x512xf32>
    %244 = tpu.matmul %236, %0, %cst_60 {dimension_numbers = #tpu.dot_dimension_numbers<[1], [0], [0], [1], [0, 0, 1, 1], [], []>} : vector<8x128xf32>, vector<128x512xf32>, vector<8x512xf32> -> vector<8x512xf32>
    %245 = arith.addf %243, %244 : vector<8x512xf32>
    %246 = vector.extract_strided_slice %245 {offsets = [0, 0], sizes = [8, 128], strides = [1, 1]} : vector<8x512xf32> to vector<8x128xf32>
    %247 = arith.negf %246 : vector<8x128xf32>
    %248 = math.exp %247 : vector<8x128xf32>
    %cst_61 = arith.constant 1.000000e+00 : f32
    %249 = vector.broadcast %cst_61 : f32 to vector<8x128xf32>
    %250 = arith.addf %249, %248 : vector<8x128xf32>
    %251 = arith.divf %249, %250 : vector<8x128xf32>
    %252 = vector.extract_strided_slice %245 {offsets = [0, 128], sizes = [8, 128], strides = [1, 1]} : vector<8x512xf32> to vector<8x128xf32>
    %253 = arith.negf %252 : vector<8x128xf32>
    %254 = math.exp %253 : vector<8x128xf32>
    %cst_62 = arith.constant 1.000000e+00 : f32
    %255 = vector.broadcast %cst_62 : f32 to vector<8x128xf32>
    %256 = arith.addf %255, %254 : vector<8x128xf32>
    %257 = arith.divf %255, %256 : vector<8x128xf32>
    %258 = vector.extract_strided_slice %245 {offsets = [0, 256], sizes = [8, 128], strides = [1, 1]} : vector<8x512xf32> to vector<8x128xf32>
    %259 = math.tanh %258 : vector<8x128xf32>
    %260 = vector.extract_strided_slice %245 {offsets = [0, 384], sizes = [8, 128], strides = [1, 1]} : vector<8x512xf32> to vector<8x128xf32>
    %261 = arith.negf %260 : vector<8x128xf32>
    %262 = math.exp %261 : vector<8x128xf32>
    %cst_63 = arith.constant 1.000000e+00 : f32
    %263 = vector.broadcast %cst_63 : f32 to vector<8x128xf32>
    %264 = arith.addf %263, %262 : vector<8x128xf32>
    %265 = arith.divf %263, %264 : vector<8x128xf32>
    %266 = arith.mulf %257, %234 : vector<8x128xf32>
    %267 = arith.mulf %251, %259 : vector<8x128xf32>
    %268 = arith.addf %266, %267 : vector<8x128xf32>
    %269 = math.tanh %268 : vector<8x128xf32>
    %270 = arith.mulf %265, %269 : vector<8x128xf32>
    %271 = arith.index_cast %c7_i32 : i32 to index
    %c0_64 = arith.constant 0 : index
    %c0_65 = arith.constant 0 : index
    %272 = vector.load %arg3[%271, %c0_64, %c0_65] : memref<8x8x128xf32, #tpu.memory_space<vmem>>, vector<1x8x128xf32>
    %273 = vector.shape_cast %272 : vector<1x8x128xf32> to vector<8x128xf32>
    %274 = vector.shape_cast %270 : vector<8x128xf32> to vector<1x8x128xf32>
    tpu.vector_store %arg3[%271, %c0_64, %c0_65], %274 {strides = array<i32>} : memref<8x8x128xf32, #tpu.memory_space<vmem>>, vector<1x8x128xf32>,
    %c8_i32 = arith.constant 8 : i32
    return
  }
  func.func @transform_0(%arg0: i32) -> (i32, i32, i32) {
    %c0_i32 = arith.constant 0 : i32
    %c0_i32_0 = arith.constant 0 : i32
    %c0_i32_1 = arith.constant 0 : i32
    %c0_i32_2 = arith.constant 0 : i32
    return %c0_i32, %c0_i32_0, %c0_i32_1 : i32, i32, i32
  }
  func.func @transform_1(%arg0: i32) -> (i32, i32) {
    %c0_i32 = arith.constant 0 : i32
    %c0_i32_0 = arith.constant 0 : i32
    %c0_i32_1 = arith.constant 0 : i32
    return %c0_i32, %c0_i32_0 : i32, i32
  }
  func.func @transform_2(%arg0: i32) -> (i32, i32, i32) {
    %c0_i32 = arith.constant 0 : i32
    %c0_i32_0 = arith.constant 0 : i32
    %c0_i32_1 = arith.constant 0 : i32
    %c0_i32_2 = arith.constant 0 : i32
    return %c0_i32, %c0_i32_0, %c0_i32_1 : i32, i32, i32
  }
}

module attributes {stable_mosaic.version = 11 : i64} {
  func.func @_matmul_bias_kernel(%arg0: i32, %arg1: memref<64x128xf32, #tpu.memory_space<vmem>>, %arg2: memref<128x256xf32, #tpu.memory_space<vmem>>, %arg3: memref<1x256xf32, #tpu.memory_space<vmem>>, %arg4: memref<64x256xf32, #tpu.memory_space<vmem>>) attributes {dimension_semantics = [#tpu.dimension_semantics<parallel>], iteration_bounds = array<i64: 1>, scalar_prefetch = 0 : i64, scratch_operands = 0 : i64, tpu.core_type = #tpu.core_type<tc>, window_params = [{transform_indices = @transform_0, window_bounds = array<i64: 64, 128>}, {pipeline_mode = #tpu.pipeline_mode<synchronous>, transform_indices = @transform_1, window_bounds = array<i64: 128, 256>}, {pipeline_mode = #tpu.pipeline_mode<synchronous>, transform_indices = @transform_2, window_bounds = array<i64: 1, 256>}, {transform_indices = @transform_3, window_bounds = array<i64: 64, 256>}]} {
    %c0 = arith.constant 0 : index
    %c0_0 = arith.constant 0 : index
    %0 = vector.load %arg1[%c0, %c0_0] : memref<64x128xf32, #tpu.memory_space<vmem>>, vector<64x128xf32>
    %c0_1 = arith.constant 0 : index
    %c0_2 = arith.constant 0 : index
    %1 = vector.load %arg2[%c0_1, %c0_2] : memref<128x256xf32, #tpu.memory_space<vmem>>, vector<128x256xf32>
    %cst = arith.constant dense<0.000000e+00> : vector<64x256xf32>
    %2 = tpu.matmul %0, %1, %cst {dimension_numbers = #tpu.dot_dimension_numbers<[1], [0], [0], [1], [0, 0, 1, 1], [], []>} : vector<64x128xf32>, vector<128x256xf32>, vector<64x256xf32> -> vector<64x256xf32>
    %c0_3 = arith.constant 0 : index
    %c0_4 = arith.constant 0 : index
    %3 = vector.load %arg3[%c0_3, %c0_4] : memref<1x256xf32, #tpu.memory_space<vmem>>, vector<1x256xf32>
    %4 = vector.broadcast %3 : vector<1x256xf32> to vector<64x256xf32>
    %5 = arith.addf %2, %4 : vector<64x256xf32>
    %c0_5 = arith.constant 0 : index
    %c0_6 = arith.constant 0 : index
    %6 = vector.load %arg4[%c0_5, %c0_6] : memref<64x256xf32, #tpu.memory_space<vmem>>, vector<64x256xf32>
    tpu.vector_store %arg4[%c0_5, %c0_6], %5 {strides = array<i32>} : memref<64x256xf32, #tpu.memory_space<vmem>>, vector<64x256xf32>,
    return
  }
  func.func @transform_0(%arg0: i32) -> (i32, i32) {
    %c0_i32 = arith.constant 0 : i32
    %c0_i32_0 = arith.constant 0 : i32
    return %arg0, %c0_i32 : i32, i32
  }
  func.func @transform_1(%arg0: i32) -> (i32, i32) {
    %c0_i32 = arith.constant 0 : i32
    %c0_i32_0 = arith.constant 0 : i32
    %c0_i32_1 = arith.constant 0 : i32
    return %c0_i32, %c0_i32_0 : i32, i32
  }
  func.func @transform_2(%arg0: i32) -> (i32, i32) {
    %c0_i32 = arith.constant 0 : i32
    %c0_i32_0 = arith.constant 0 : i32
    %c0_i32_1 = arith.constant 0 : i32
    return %c0_i32, %c0_i32_0 : i32, i32
  }
  func.func @transform_3(%arg0: i32) -> (i32, i32) {
    %c0_i32 = arith.constant 0 : i32
    %c0_i32_0 = arith.constant 0 : i32
    return %arg0, %c0_i32 : i32, i32
  }
}

</mosaic_0001>

<llo_original>
// kernel: decoder_rnn_forward.5
$region0: #{decoder_rnn_forward.5}
  #allocation0 [shape = 'u32[]', space=smem, size = 0x4, offset = 0x4, fixed_abs, tag = 'smem constant byte address 0x4 - core index']
  #allocation1 [shape = 'u32[144,128]{1,0:T(1,128)}', space=vmem, size = 0x12000, scoped, tag = 'internal scratch']
  %s0 = inlined_call_operand.vmem [shape: f32[64,128], index: 0, kind: input, shape index: {}]
  %s1 = inlined_call_operand.vmem [shape: f32[128,256], index: 1, kind: input, shape index: {}]
  %s2 = inlined_call_operand.vmem [shape: f32[1,256], index: 2, kind: input, shape index: {}]
  %s3 = inlined_call_operand.vmem [shape: f32[64,256], index: 3, kind: output, shape index: {}]
  %s4 = sld [smem:[#allocation0]]
  $region22: #{decoder_rnn_forward.5} parent=0
    _
  %s6 = ssub.s32 1, %s4
  %s7 = scalar_select 0, %s6, %s4
  // Predicated region
  $region2: #{decoder_rnn_forward.5} parent=0 // pred_check
    _
  $region3: #{decoder_rnn_forward.5} parent=0 // pred_check_branch
    %9 = sbr.rel (0) target = $region5
  $region4: #{decoder_rnn_forward.5} parent=0 // pred_region
    _
  $region5: #{decoder_rnn_forward.5} parent=0 // pred_fallthru
    _
  // Predicated region
  $region6: #{decoder_rnn_forward.5} parent=0 // pred_check
    _
  $region7: #{decoder_rnn_forward.5} parent=0 // pred_check_branch
    %11 = sbr.rel (0) target = $region9
  $region8: #{decoder_rnn_forward.5} parent=0 // pred_region
    _
  $region9: #{decoder_rnn_forward.5} parent=0 // pred_fallthru
    _
  // Predicated region
  $region10: #{decoder_rnn_forward.5} parent=0 // pred_check
    _
  $region11: #{decoder_rnn_forward.5} parent=0 // pred_check_branch
    %13 = sbr.rel (0) target = $region13
  $region12: #{decoder_rnn_forward.5} parent=0 // pred_region
    _
  $region13: #{decoder_rnn_forward.5} parent=0 // pred_fallthru
    _
  %v14 = vld [vmem:[%s0] sm:$0xff]
  %v15 = vld [vmem:[%s0 + $0x8] sm:$0xff]
  %v16 = vld [vmem:[%s0 + $0x10] sm:$0xff]
  %v17 = vld [vmem:[%s0 + $0x18] sm:$0xff]
  %v18 = vld [vmem:[%s0 + $0x20] sm:$0xff]
  %v19 = vld [vmem:[%s0 + $0x28] sm:$0xff]
  %v20 = vld [vmem:[%s0 + $0x30] sm:$0xff]
  %v21 = vld [vmem:[%s0 + $0x38] sm:$0xff]
  %v22 = vld [vmem:[%s1] sm:$0xff]
  %v23 = vld [vmem:[%s1 + $0x8] sm:$0xff]
  %v24 = vld [vmem:[%s1 + $0x10] sm:$0xff]
  %v25 = vld [vmem:[%s1 + $0x18] sm:$0xff]
  %v26 = vld [vmem:[%s1 + $0x20] sm:$0xff]
  %v27 = vld [vmem:[%s1 + $0x28] sm:$0xff]
  %v28 = vld [vmem:[%s1 + $0x30] sm:$0xff]
  %v29 = vld [vmem:[%s1 + $0x38] sm:$0xff]
  %v30 = vld [vmem:[%s1 + $0x40] sm:$0xff]
  %v31 = vld [vmem:[%s1 + $0x48] sm:$0xff]
  %v32 = vld [vmem:[%s1 + $0x50] sm:$0xff]
  %v33 = vld [vmem:[%s1 + $0x58] sm:$0xff]
  %v34 = vld [vmem:[%s1 + $0x60] sm:$0xff]
  %v35 = vld [vmem:[%s1 + $0x68] sm:$0xff]
  %v36 = vld [vmem:[%s1 + $0x70] sm:$0xff]
  %v37 = vld [vmem:[%s1 + $0x78] sm:$0xff]
  %v38 = vld [vmem:[%s1 + $0x80] sm:$0xff]
  %v39 = vld [vmem:[%s1 + $0x88] sm:$0xff]
  %v40 = vld [vmem:[%s1 + $0x90] sm:$0xff]
  %v41 = vld [vmem:[%s1 + $0x98] sm:$0xff]
  %v42 = vld [vmem:[%s1 + $0xa0] sm:$0xff]
  %v43 = vld [vmem:[%s1 + $0xa8] sm:$0xff]
  %v44 = vld [vmem:[%s1 + $0xb0] sm:$0xff]
  %v45 = vld [vmem:[%s1 + $0xb8] sm:$0xff]
  %v46 = vld [vmem:[%s1 + $0xc0] sm:$0xff]
  %v47 = vld [vmem:[%s1 + $0xc8] sm:$0xff]
  %v48 = vld [vmem:[%s1 + $0xd0] sm:$0xff]
  %v49 = vld [vmem:[%s1 + $0xd8] sm:$0xff]
  %v50 = vld [vmem:[%s1 + $0xe0] sm:$0xff]
  %v51 = vld [vmem:[%s1 + $0xe8] sm:$0xff]
  %v52 = vld [vmem:[%s1 + $0xf0] sm:$0xff]
  %v53 = vld [vmem:[%s1 + $0xf8] sm:$0xff]
  %v54 = vld [vmem:[%s2] sm:$0x3]
  %v56 = vlaneseq
  %v57 = vshrl.u32 %v56, 7
  %v58 = vsub.s32 0, %v57
  %v59 = vrot.slane %v54, %v58
  %v60 = vlaneseq
  %v61 = vshrl.u32 %v60, 7
  %v62 = vsub.s32 1, %v61
  %v63 = vrot.slane %v54, %v62
  %66 = vmatprep.subr.mxu0 %v23
  %67 = vmatpush1.msra.mxu0 %v22
  %68 = vmatprep.subr.mxu0 %v25
  %69 = vmatpush1.msra.mxu0 %v24
  %70 = vmatprep.subr.mxu0 %v27
  %71 = vmatpush1.msra.mxu0 %v26
  %72 = vmatprep.subr.mxu0 %v29
  %73 = vmatpush1.msra.mxu0 %v28
  %74 = vmatprep.subr.mxu0 %v31
  %75 = vmatpush1.msra.mxu0 %v30
  %76 = vmatprep.subr.mxu0 %v33
  %77 = vmatpush1.msra.mxu0 %v32
  %78 = vmatprep.subr.mxu0 %v35
  %79 = vmatpush1.msra.mxu0 %v34
  %80 = vmatprep.subr.mxu0 %v37
  %81 = vmatpush1.msra.mxu0 %v36
  %82 = vmatprep.subr.mxu0 %v39
  %83 = vmatpush1.msra.mxu0 %v38
  %84 = vmatprep.subr.mxu0 %v41
  %85 = vmatpush1.msra.mxu0 %v40
  %86 = vmatprep.subr.mxu0 %v43
  %87 = vmatpush1.msra.mxu0 %v42
  %88 = vmatprep.subr.mxu0 %v45
  %89 = vmatpush1.msra.mxu0 %v44
  %90 = vmatprep.subr.mxu0 %v47
  %91 = vmatpush1.msra.mxu0 %v46
  %92 = vmatprep.subr.mxu0 %v49
  %93 = vmatpush1.msra.mxu0 %v48
  %94 = vmatprep.subr.mxu0 %v51
  %95 = vmatpush1.msra.mxu0 %v50
  %96 = vmatprep.subr.mxu0 %v53
  %97 = vmatpush1.msra.mxu0 %v52
  %98 = vmatprep.subr.mxu0 0.0
  %99 = vmatpush1.msra.mxu0 0.0
  %100 = vmatprep.subr.mxu0 0.0
  %101 = vmatpush1.msra.mxu0 0.0
  %102 = vmatprep.subr.mxu0 0.0
  %103 = vmatpush1.msra.mxu0 0.0
  %104 = vmatprep.subr.mxu0 0.0
  %105 = vmatpush1.msra.mxu0 0.0
  %106 = vmatprep.subr.mxu0 0.0
  %107 = vmatpush1.msra.mxu0 0.0
  %108 = vmatprep.subr.mxu0 0.0
  %109 = vmatpush1.msra.mxu0 0.0
  %110 = vmatprep.subr.mxu0 0.0
  %111 = vmatpush1.msra.mxu0 0.0
  %112 = vmatprep.subr.mxu0 0.0
  %113 = vmatpush1.msra.mxu0 0.0
  %114 = vmatprep.subr.mxu0 0.0
  %115 = vmatpush1.msra.mxu0 0.0
  %116 = vmatprep.subr.mxu0 0.0
  %117 = vmatpush1.msra.mxu0 0.0
  %118 = vmatprep.subr.mxu0 0.0
  %119 = vmatpush1.msra.mxu0 0.0
  %120 = vmatprep.subr.mxu0 0.0
  %121 = vmatpush1.msra.mxu0 0.0
  %122 = vmatprep.subr.mxu0 0.0
  %123 = vmatpush1.msra.mxu0 0.0
  %124 = vmatprep.subr.mxu0 0.0
  %125 = vmatpush1.msra.mxu0 0.0
  %126 = vmatprep.subr.mxu0 0.0
  %127 = vmatpush1.msra.mxu0 0.0
  %128 = vmatprep.subr.mxu0 0.0
  %129 = vmatpush1.msra.mxu0 0.0
  %130 = vmatprep.mubr.f32.mxu0 0.0
  %131 = vmatmul.mubr.f32.gmra.mrb[0].mxu0 %v14
  %v132 = vpop.f32.mrb[0].mxu0
  %v133 = vadd.f32 %v59, %v132
  %v134 = vpop.f32.mrb[0].mxu0
  %v135 = vadd.f32 %v63, %v134
  %136 = vmatprep.mubr.f32.mxu0 0.0
  %137 = vmatmul.mubr.f32.gmra.mrb[0].mxu0 %v15
  %v138 = vpop.f32.mrb[0].mxu0
  %v139 = vadd.f32 %v59, %v138
  %v140 = vpop.f32.mrb[0].mxu0
  %v141 = vadd.f32 %v63, %v140
  %142 = vmatprep.mubr.f32.mxu0 0.0
  %143 = vmatmul.mubr.f32.gmra.mrb[0].mxu0 %v16
  %v144 = vpop.f32.mrb[0].mxu0
  %v145 = vadd.f32 %v59, %v144
  %v146 = vpop.f32.mrb[0].mxu0
  %v147 = vadd.f32 %v63, %v146
  %148 = vmatprep.mubr.f32.mxu0 0.0
  %149 = vmatmul.mubr.f32.gmra.mrb[0].mxu0 %v17
  %v150 = vpop.f32.mrb[0].mxu0
  %v151 = vadd.f32 %v59, %v150
  %v152 = vpop.f32.mrb[0].mxu0
  %v153 = vadd.f32 %v63, %v152
  %154 = vmatprep.mubr.f32.mxu0 0.0
  %155 = vmatmul.mubr.f32.gmra.mrb[0].mxu0 %v18
  %v156 = vpop.f32.mrb[0].mxu0
  %v157 = vadd.f32 %v59, %v156
  %v158 = vpop.f32.mrb[0].mxu0
  %v159 = vadd.f32 %v63, %v158
  %160 = vmatprep.mubr.f32.mxu0 0.0
  %161 = vmatmul.mubr.f32.gmra.mrb[0].mxu0 %v19
  %v162 = vpop.f32.mrb[0].mxu0
  %v163 = vadd.f32 %v59, %v162
  %v164 = vpop.f32.mrb[0].mxu0
  %v165 = vadd.f32 %v63, %v164
  %166 = vmatprep.mubr.f32.mxu0 0.0
  %167 = vmatmul.mubr.f32.gmra.mrb[0].mxu0 %v20
  %v168 = vpop.f32.mrb[0].mxu0
  %v169 = vadd.f32 %v59, %v168
  %v170 = vpop.f32.mrb[0].mxu0
  %v171 = vadd.f32 %v63, %v170
  %172 = vmatprep.mubr.f32.mxu0 0.0
  %173 = vmatmul.mubr.f32.gmra.mrb[0].mxu0 %v21
  %v174 = vpop.f32.mrb[0].mxu0
  %v175 = vadd.f32 %v59, %v174
  %v176 = vpop.f32.mrb[0].mxu0
  %v177 = vadd.f32 %v63, %v176
  %178 = vdwg.mxu0
  %179 = vst [vmem:[%s3] sm:$0xff] %v133
  %180 = vst [vmem:[%s3 + $0x8] sm:$0xff] %v135
  %181 = vst [vmem:[%s3 + $0x10] sm:$0xff] %v139
  %182 = vst [vmem:[%s3 + $0x18] sm:$0xff] %v141
  %183 = vst [vmem:[%s3 + $0x20] sm:$0xff] %v145
  %184 = vst [vmem:[%s3 + $0x28] sm:$0xff] %v147
  %185 = vst [vmem:[%s3 + $0x30] sm:$0xff] %v151
  %186 = vst [vmem:[%s3 + $0x38] sm:$0xff] %v153
  %187 = vst [vmem:[%s3 + $0x40] sm:$0xff] %v157
  %188 = vst [vmem:[%s3 + $0x48] sm:$0xff] %v159
  %189 = vst [vmem:[%s3 + $0x50] sm:$0xff] %v163
  %190 = vst [vmem:[%s3 + $0x58] sm:$0xff] %v165
  %191 = vst [vmem:[%s3 + $0x60] sm:$0xff] %v169
  %192 = vst [vmem:[%s3 + $0x68] sm:$0xff] %v171
  %193 = vst [vmem:[%s3 + $0x70] sm:$0xff] %v175
  %194 = vst [vmem:[%s3 + $0x78] sm:$0xff] %v177
  // Predicated region
  $region14: #{decoder_rnn_forward.5} parent=0 // pred_check
    _
  $region15: #{decoder_rnn_forward.5} parent=0 // pred_check_branch
    %196 = sbr.rel (0) target = $region17
  $region16: #{decoder_rnn_forward.5} parent=0 // pred_region
    _
  $region17: #{decoder_rnn_forward.5} parent=0 // pred_fallthru
    _
  // Predicated region
  $region18: #{decoder_rnn_forward.5} parent=0 // pred_check
    _
  $region19: #{decoder_rnn_forward.5} parent=0 // pred_check_branch
    %198 = sbr.rel (0) target = $region21
  $region20: #{decoder_rnn_forward.5} parent=0 // pred_region
    _
  $region21: #{decoder_rnn_forward.5} parent=0 // pred_fallthru
    _

// kernel: decoder_rnn_forward.3
$region0: #{decoder_rnn_forward.3}
  #allocation0 [shape = 'u32[]', space=smem, size = 0x4, offset = 0x4, fixed_abs, tag = 'smem constant byte address 0x4 - core index']
  #allocation1 [shape = 'u32[144,128]{1,0:T(1,128)}', space=vmem, size = 0x12000, scoped, tag = 'internal scratch']
  %s0 = inlined_call_operand.vmem [shape: f32[64,64], index: 0, kind: input, shape index: {}]
  %s1 = inlined_call_operand.vmem [shape: f32[64,512], index: 1, kind: input, shape index: {}]
  %s2 = inlined_call_operand.vmem [shape: f32[1,512], index: 2, kind: input, shape index: {}]
  %s3 = inlined_call_operand.vmem [shape: f32[64,512], index: 3, kind: output, shape index: {}]
  %s4 = sld [smem:[#allocation0]]
  $region22: #{decoder_rnn_forward.3} parent=0
    _
  %s6 = ssub.s32 1, %s4
  %s7 = scalar_select 0, %s6, %s4
  // Predicated region
  $region2: #{decoder_rnn_forward.3} parent=0 // pred_check
    _
  $region3: #{decoder_rnn_forward.3} parent=0 // pred_check_branch
    %9 = sbr.rel (0) target = $region5
  $region4: #{decoder_rnn_forward.3} parent=0 // pred_region
    _
  $region5: #{decoder_rnn_forward.3} parent=0 // pred_fallthru
    _
  // Predicated region
  $region6: #{decoder_rnn_forward.3} parent=0 // pred_check
    _
  $region7: #{decoder_rnn_forward.3} parent=0 // pred_check_branch
    %11 = sbr.rel (0) target = $region9
  $region8: #{decoder_rnn_forward.3} parent=0 // pred_region
    _
  $region9: #{decoder_rnn_forward.3} parent=0 // pred_fallthru
    _
  // Predicated region
  $region10: #{decoder_rnn_forward.3} parent=0 // pred_check
    _
  $region11: #{decoder_rnn_forward.3} parent=0 // pred_check_branch
    %13 = sbr.rel (0) target = $region13
  $region12: #{decoder_rnn_forward.3} parent=0 // pred_region
    _
  $region13: #{decoder_rnn_forward.3} parent=0 // pred_fallthru
    _
  %v14 = vld [vmem:[%s0] sm:$0xff]
  %v15 = vld [vmem:[%s0 + $0x8] sm:$0xff]
  %v16 = vld [vmem:[%s0 + $0x10] sm:$0xff]
  %v17 = vld [vmem:[%s0 + $0x18] sm:$0xff]
  %v18 = vld [vmem:[%s0 + $0x20] sm:$0xff]
  %v19 = vld [vmem:[%s0 + $0x28] sm:$0xff]
  %v20 = vld [vmem:[%s0 + $0x30] sm:$0xff]
  %v21 = vld [vmem:[%s0 + $0x38] sm:$0xff]
  %v22 = vld [vmem:[%s1] sm:$0xff]
  %v23 = vld [vmem:[%s1 + $0x8] sm:$0xff]
  %v24 = vld [vmem:[%s1 + $0x10] sm:$0xff]
  %v25 = vld [vmem:[%s1 + $0x18] sm:$0xff]
  %v26 = vld [vmem:[%s1 + $0x20] sm:$0xff]
  %v27 = vld [vmem:[%s1 + $0x28] sm:$0xff]
  %v28 = vld [vmem:[%s1 + $0x30] sm:$0xff]
  %v29 = vld [vmem:[%s1 + $0x38] sm:$0xff]
  %v30 = vld [vmem:[%s1 + $0x40] sm:$0xff]
  %v31 = vld [vmem:[%s1 + $0x48] sm:$0xff]
  %v32 = vld [vmem:[%s1 + $0x50] sm:$0xff]
  %v33 = vld [vmem:[%s1 + $0x58] sm:$0xff]
  %v34 = vld [vmem:[%s1 + $0x60] sm:$0xff]
  %v35 = vld [vmem:[%s1 + $0x68] sm:$0xff]
  %v36 = vld [vmem:[%s1 + $0x70] sm:$0xff]
  %v37 = vld [vmem:[%s1 + $0x78] sm:$0xff]
  %v38 = vld [vmem:[%s1 + $0x80] sm:$0xff]
  %v39 = vld [vmem:[%s1 + $0x88] sm:$0xff]
  %v40 = vld [vmem:[%s1 + $0x90] sm:$0xff]
  %v41 = vld [vmem:[%s1 + $0x98] sm:$0xff]
  %v42 = vld [vmem:[%s1 + $0xa0] sm:$0xff]
  %v43 = vld [vmem:[%s1 + $0xa8] sm:$0xff]
  %v44 = vld [vmem:[%s1 + $0xb0] sm:$0xff]
  %v45 = vld [vmem:[%s1 + $0xb8] sm:$0xff]
  %v46 = vld [vmem:[%s1 + $0xc0] sm:$0xff]
  %v47 = vld [vmem:[%s1 + $0xc8] sm:$0xff]
  %v48 = vld [vmem:[%s1 + $0xd0] sm:$0xff]
  %v49 = vld [vmem:[%s1 + $0xd8] sm:$0xff]
  %v50 = vld [vmem:[%s1 + $0xe0] sm:$0xff]
  %v51 = vld [vmem:[%s1 + $0xe8] sm:$0xff]
  %v52 = vld [vmem:[%s1 + $0xf0] sm:$0xff]
  %v53 = vld [vmem:[%s1 + $0xf8] sm:$0xff]
  %v54 = vld [vmem:[%s2] sm:$0xf]
  %v56 = vlaneseq
  %v57 = vshrl.u32 %v56, 7
  %v58 = vsub.s32 0, %v57
  %v59 = vrot.slane %v54, %v58
  %v60 = vlaneseq
  %v61 = vshrl.u32 %v60, 7
  %v62 = vsub.s32 1, %v61
  %v63 = vrot.slane %v54, %v62
  %v64 = vlaneseq
  %v65 = vshrl.u32 %v64, 7
  %v66 = vsub.s32 2, %v65
  %v67 = vrot.slane %v54, %v66
  %v68 = vlaneseq
  %v69 = vshrl.u32 %v68, 7
  %v70 = vsub.s32 3, %v69
  %v71 = vrot.slane %v54, %v70
  %vm76 = vcmask 523264
  %v78 = vsel %vm76, %v14, 0
  %v81 = vsel %vm76, %v15, 0
  %v84 = vsel %vm76, %v16, 0
  %v87 = vsel %vm76, %v17, 0
  %v90 = vsel %vm76, %v18, 0
  %v93 = vsel %vm76, %v19, 0
  %v96 = vsel %vm76, %v20, 0
  %v99 = vsel %vm76, %v21, 0
  %101 = vmatprep.subr.mxu0 %v23
  %102 = vmatpush1.msra.mxu0 %v22
  %103 = vmatprep.subr.mxu0 %v27
  %104 = vmatpush1.msra.mxu0 %v26
  %105 = vmatprep.subr.mxu0 %v31
  %106 = vmatpush1.msra.mxu0 %v30
  %107 = vmatprep.subr.mxu0 %v35
  %108 = vmatpush1.msra.mxu0 %v34
  %109 = vmatprep.subr.mxu0 %v39
  %110 = vmatpush1.msra.mxu0 %v38
  %111 = vmatprep.subr.mxu0 %v43
  %112 = vmatpush1.msra.mxu0 %v42
  %113 = vmatprep.subr.mxu0 %v47
  %114 = vmatpush1.msra.mxu0 %v46
  %115 = vmatprep.subr.mxu0 %v51
  %116 = vmatpush1.msra.mxu0 %v50
  %117 = vmatprep.subr.mxu0 0.0
  %118 = vmatpush1.msra.mxu0 0.0
  %119 = vmatprep.subr.mxu0 0.0
  %120 = vmatpush1.msra.mxu0 0.0
  %121 = vmatprep.subr.mxu0 0.0
  %122 = vmatpush1.msra.mxu0 0.0
  %123 = vmatprep.subr.mxu0 0.0
  %124 = vmatpush1.msra.mxu0 0.0
  %125 = vmatprep.subr.mxu0 0.0
  %126 = vmatpush1.msra.mxu0 0.0
  %127 = vmatprep.subr.mxu0 0.0
  %128 = vmatpush1.msra.mxu0 0.0
  %129 = vmatprep.subr.mxu0 0.0
  %130 = vmatpush1.msra.mxu0 0.0
  %131 = vmatprep.subr.mxu0 0.0
  %132 = vmatpush1.msra.mxu0 0.0
  %133 = vmatprep.subr.mxu0 0.0
  %134 = vmatpush1.msra.mxu0 0.0
  %135 = vmatprep.subr.mxu0 0.0
  %136 = vmatpush1.msra.mxu0 0.0
  %137 = vmatprep.subr.mxu0 0.0
  %138 = vmatpush1.msra.mxu0 0.0
  %139 = vmatprep.subr.mxu0 0.0
  %140 = vmatpush1.msra.mxu0 0.0
  %141 = vmatprep.subr.mxu0 0.0
  %142 = vmatpush1.msra.mxu0 0.0
  %143 = vmatprep.subr.mxu0 0.0
  %144 = vmatpush1.msra.mxu0 0.0
  %145 = vmatprep.subr.mxu0 0.0
  %146 = vmatpush1.msra.mxu0 0.0
  %147 = vmatprep.subr.mxu0 0.0
  %148 = vmatpush1.msra.mxu0 0.0
  %149 = vmatprep.subr.mxu0 0.0
  %150 = vmatpush1.msra.mxu0 0.0
  %151 = vmatprep.subr.mxu0 0.0
  %152 = vmatpush1.msra.mxu0 0.0
  %153 = vmatprep.subr.mxu0 0.0
  %154 = vmatpush1.msra.mxu0 0.0
  %155 = vmatprep.subr.mxu0 0.0
  %156 = vmatpush1.msra.mxu0 0.0
  %157 = vmatprep.subr.mxu0 0.0
  %158 = vmatpush1.msra.mxu0 0.0
  %159 = vmatprep.subr.mxu0 0.0
  %160 = vmatpush1.msra.mxu0 0.0
  %161 = vmatprep.subr.mxu0 0.0
  %162 = vmatpush1.msra.mxu0 0.0
  %163 = vmatprep.subr.mxu0 0.0
  %164 = vmatpush1.msra.mxu0 0.0
  %165 = vmatprep.mubr.f32.mxu0 0.0
  %166 = vmatmul.mubr.f32.gmra.mrb[0].mxu0 %v78
  %v167 = vpop.f32.mrb[0].mxu0
  %v168 = vadd.f32 %v59, %v167
  %v169 = vpop.f32.mrb[0].mxu0
  %v170 = vadd.f32 %v63, %v169
  %171 = vmatprep.mubr.f32.mxu0 0.0
  %172 = vmatmul.mubr.f32.gmra.mrb[0].mxu0 %v81
  %v173 = vpop.f32.mrb[0].mxu0
  %v174 = vadd.f32 %v59, %v173
  %v175 = vpop.f32.mrb[0].mxu0
  %v176 = vadd.f32 %v63, %v175
  %177 = vmatprep.mubr.f32.mxu0 0.0
  %178 = vmatmul.mubr.f32.gmra.mrb[0].mxu0 %v84
  %v179 = vpop.f32.mrb[0].mxu0
  %v180 = vadd.f32 %v59, %v179
  %v181 = vpop.f32.mrb[0].mxu0
  %v182 = vadd.f32 %v63, %v181
  %183 = vmatprep.mubr.f32.mxu0 0.0
  %184 = vmatmul.mubr.f32.gmra.mrb[0].mxu0 %v87
  %v185 = vpop.f32.mrb[0].mxu0
  %v186 = vadd.f32 %v59, %v185
  %v187 = vpop.f32.mrb[0].mxu0
  %v188 = vadd.f32 %v63, %v187
  %189 = vmatprep.mubr.f32.mxu0 0.0
  %190 = vmatmul.mubr.f32.gmra.mrb[0].mxu0 %v90
  %v191 = vpop.f32.mrb[0].mxu0
  %v192 = vadd.f32 %v59, %v191
  %v193 = vpop.f32.mrb[0].mxu0
  %v194 = vadd.f32 %v63, %v193
  %195 = vmatprep.mubr.f32.mxu0 0.0
  %196 = vmatmul.mubr.f32.gmra.mrb[0].mxu0 %v93
  %v197 = vpop.f32.mrb[0].mxu0
  %v198 = vadd.f32 %v59, %v197
  %v199 = vpop.f32.mrb[0].mxu0
  %v200 = vadd.f32 %v63, %v199
  %201 = vmatprep.mubr.f32.mxu0 0.0
  %202 = vmatmul.mubr.f32.gmra.mrb[0].mxu0 %v96
  %v203 = vpop.f32.mrb[0].mxu0
  %v204 = vadd.f32 %v59, %v203
  %v205 = vpop.f32.mrb[0].mxu0
  %v206 = vadd.f32 %v63, %v205
  %207 = vmatprep.mubr.f32.mxu0 0.0
  %208 = vmatmul.mubr.f32.gmra.mrb[0].mxu0 %v99
  %v209 = vpop.f32.mrb[0].mxu0
  %v210 = vadd.f32 %v59, %v209
  %v211 = vpop.f32.mrb[0].mxu0
  %v212 = vadd.f32 %v63, %v211
  %213 = vdwg.mxu0
  %214 = vmatprep.subr.mxu0 %v25
  %215 = vmatpush1.msra.mxu0 %v24
  %216 = vmatprep.subr.mxu0 %v29
  %217 = vmatpush1.msra.mxu0 %v28
  %218 = vmatprep.subr.mxu0 %v33
  %219 = vmatpush1.msra.mxu0 %v32
  %220 = vmatprep.subr.mxu0 %v37
  %221 = vmatpush1.msra.mxu0 %v36
  %222 = vmatprep.subr.mxu0 %v41
  %223 = vmatpush1.msra.mxu0 %v40
  %224 = vmatprep.subr.mxu0 %v45
  %225 = vmatpush1.msra.mxu0 %v44
  %226 = vmatprep.subr.mxu0 %v49
  %227 = vmatpush1.msra.mxu0 %v48
  %228 = vmatprep.subr.mxu0 %v53
  %229 = vmatpush1.msra.mxu0 %v52
  %230 = vmatprep.subr.mxu0 0.0
  %231 = vmatpush1.msra.mxu0 0.0
  %232 = vmatprep.subr.mxu0 0.0
  %233 = vmatpush1.msra.mxu0 0.0
  %234 = vmatprep.subr.mxu0 0.0
  %235 = vmatpush1.msra.mxu0 0.0
  %236 = vmatprep.subr.mxu0 0.0
  %237 = vmatpush1.msra.mxu0 0.0
  %238 = vmatprep.subr.mxu0 0.0
  %239 = vmatpush1.msra.mxu0 0.0
  %240 = vmatprep.subr.mxu0 0.0
  %241 = vmatpush1.msra.mxu0 0.0
  %242 = vmatprep.subr.mxu0 0.0
  %243 = vmatpush1.msra.mxu0 0.0
  %244 = vmatprep.subr.mxu0 0.0
  %245 = vmatpush1.msra.mxu0 0.0
  %246 = vmatprep.subr.mxu0 0.0
  %247 = vmatpush1.msra.mxu0 0.0
  %248 = vmatprep.subr.mxu0 0.0
  %249 = vmatpush1.msra.mxu0 0.0
  %250 = vmatprep.subr.mxu0 0.0
  %251 = vmatpush1.msra.mxu0 0.0
  %252 = vmatprep.subr.mxu0 0.0
  %253 = vmatpush1.msra.mxu0 0.0
  %254 = vmatprep.subr.mxu0 0.0
  %255 = vmatpush1.msra.mxu0 0.0
  %256 = vmatprep.subr.mxu0 0.0
  %257 = vmatpush1.msra.mxu0 0.0
  %258 = vmatprep.subr.mxu0 0.0
  %259 = vmatpush1.msra.mxu0 0.0
  %260 = vmatprep.subr.mxu0 0.0
  %261 = vmatpush1.msra.mxu0 0.0
  %262 = vmatprep.subr.mxu0 0.0
  %263 = vmatpush1.msra.mxu0 0.0
  %264 = vmatprep.subr.mxu0 0.0
  %265 = vmatpush1.msra.mxu0 0.0
  %266 = vmatprep.subr.mxu0 0.0
  %267 = vmatpush1.msra.mxu0 0.0
  %268 = vmatprep.subr.mxu0 0.0
  %269 = vmatpush1.msra.mxu0 0.0
  %270 = vmatprep.subr.mxu0 0.0
  %271 = vmatpush1.msra.mxu0 0.0
  %272 = vmatprep.subr.mxu0 0.0
  %273 = vmatpush1.msra.mxu0 0.0
  %274 = vmatprep.subr.mxu0 0.0
  %275 = vmatpush1.msra.mxu0 0.0
  %276 = vmatprep.subr.mxu0 0.0
  %277 = vmatpush1.msra.mxu0 0.0
  %278 = vmatprep.mubr.f32.mxu0 0.0
  %279 = vmatmul.mubr.f32.gmra.mrb[0].mxu0 %v78
  %v280 = vpop.f32.mrb[0].mxu0
  %v281 = vadd.f32 %v67, %v280
  %v282 = vpop.f32.mrb[0].mxu0
  %v283 = vadd.f32 %v71, %v282
  %284 = vmatprep.mubr.f32.mxu0 0.0
  %285 = vmatmul.mubr.f32.gmra.mrb[0].mxu0 %v81
  %v286 = vpop.f32.mrb[0].mxu0
  %v287 = vadd.f32 %v67, %v286
  %v288 = vpop.f32.mrb[0].mxu0
  %v289 = vadd.f32 %v71, %v288
  %290 = vmatprep.mubr.f32.mxu0 0.0
  %291 = vmatmul.mubr.f32.gmra.mrb[0].mxu0 %v84
  %v292 = vpop.f32.mrb[0].mxu0
  %v293 = vadd.f32 %v67, %v292
  %v294 = vpop.f32.mrb[0].mxu0
  %v295 = vadd.f32 %v71, %v294
  %296 = vmatprep.mubr.f32.mxu0 0.0
  %297 = vmatmul.mubr.f32.gmra.mrb[0].mxu0 %v87
  %v298 = vpop.f32.mrb[0].mxu0
  %v299 = vadd.f32 %v67, %v298
  %v300 = vpop.f32.mrb[0].mxu0
  %v301 = vadd.f32 %v71, %v300
  %302 = vmatprep.mubr.f32.mxu0 0.0
  %303 = vmatmul.mubr.f32.gmra.mrb[0].mxu0 %v90
  %v304 = vpop.f32.mrb[0].mxu0
  %v305 = vadd.f32 %v67, %v304
  %v306 = vpop.f32.mrb[0].mxu0
  %v307 = vadd.f32 %v71, %v306
  %308 = vmatprep.mubr.f32.mxu0 0.0
  %309 = vmatmul.mubr.f32.gmra.mrb[0].mxu0 %v93
  %v310 = vpop.f32.mrb[0].mxu0
  %v311 = vadd.f32 %v67, %v310
  %v312 = vpop.f32.mrb[0].mxu0
  %v313 = vadd.f32 %v71, %v312
  %314 = vmatprep.mubr.f32.mxu0 0.0
  %315 = vmatmul.mubr.f32.gmra.mrb[0].mxu0 %v96
  %v316 = vpop.f32.mrb[0].mxu0
  %v317 = vadd.f32 %v67, %v316
  %v318 = vpop.f32.mrb[0].mxu0
  %v319 = vadd.f32 %v71, %v318
  %320 = vmatprep.mubr.f32.mxu0 0.0
  %321 = vmatmul.mubr.f32.gmra.mrb[0].mxu0 %v99
  %v322 = vpop.f32.mrb[0].mxu0
  %v323 = vadd.f32 %v67, %v322
  %v324 = vpop.f32.mrb[0].mxu0
  %v325 = vadd.f32 %v71, %v324
  %326 = vdwg.mxu0
  %327 = vst [vmem:[%s3] sm:$0xff] %v168
  %328 = vst [vmem:[%s3 + $0x8] sm:$0xff] %v170
  %329 = vst [vmem:[%s3 + $0x10] sm:$0xff] %v281
  %330 = vst [vmem:[%s3 + $0x18] sm:$0xff] %v283
  %331 = vst [vmem:[%s3 + $0x20] sm:$0xff] %v174
  %332 = vst [vmem:[%s3 + $0x28] sm:$0xff] %v176
  %333 = vst [vmem:[%s3 + $0x30] sm:$0xff] %v287
  %334 = vst [vmem:[%s3 + $0x38] sm:$0xff] %v289
  %335 = vst [vmem:[%s3 + $0x40] sm:$0xff] %v180
  %336 = vst [vmem:[%s3 + $0x48] sm:$0xff] %v182
  %337 = vst [vmem:[%s3 + $0x50] sm:$0xff] %v293
  %338 = vst [vmem:[%s3 + $0x58] sm:$0xff] %v295
  %339 = vst [vmem:[%s3 + $0x60] sm:$0xff] %v186
  %340 = vst [vmem:[%s3 + $0x68] sm:$0xff] %v188
  %341 = vst [vmem:[%s3 + $0x70] sm:$0xff] %v299
  %342 = vst [vmem:[%s3 + $0x78] sm:$0xff] %v301
  %343 = vst [vmem:[%s3 + $0x80] sm:$0xff] %v192
  %344 = vst [vmem:[%s3 + $0x88] sm:$0xff] %v194
  %345 = vst [vmem:[%s3 + $0x90] sm:$0xff] %v305
  %346 = vst [vmem:[%s3 + $0x98] sm:$0xff] %v307
  %347 = vst [vmem:[%s3 + $0xa0] sm:$0xff] %v198
  %348 = vst [vmem:[%s3 + $0xa8] sm:$0xff] %v200
  %349 = vst [vmem:[%s3 + $0xb0] sm:$0xff] %v311
  %350 = vst [vmem:[%s3 + $0xb8] sm:$0xff] %v313
  %351 = vst [vmem:[%s3 + $0xc0] sm:$0xff] %v204
  %352 = vst [vmem:[%s3 + $0xc8] sm:$0xff] %v206
  %353 = vst [vmem:[%s3 + $0xd0] sm:$0xff] %v317
  %354 = vst [vmem:[%s3 + $0xd8] sm:$0xff] %v319
  %355 = vst [vmem:[%s3 + $0xe0] sm:$0xff] %v210
  %356 = vst [vmem:[%s3 + $0xe8] sm:$0xff] %v212
  %357 = vst [vmem:[%s3 + $0xf0] sm:$0xff] %v323
  %358 = vst [vmem:[%s3 + $0xf8] sm:$0xff] %v325
  // Predicated region
  $region14: #{decoder_rnn_forward.3} parent=0 // pred_check
    _
  $region15: #{decoder_rnn_forward.3} parent=0 // pred_check_branch
    %360 = sbr.rel (0) target = $region17
  $region16: #{decoder_rnn_forward.3} parent=0 // pred_region
    _
  $region17: #{decoder_rnn_forward.3} parent=0 // pred_fallthru
    _
  // Predicated region
  $region18: #{decoder_rnn_forward.3} parent=0 // pred_check
    _
  $region19: #{decoder_rnn_forward.3} parent=0 // pred_check_branch
    %362 = sbr.rel (0) target = $region21
  $region20: #{decoder_rnn_forward.3} parent=0 // pred_region
    _
  $region21: #{decoder_rnn_forward.3} parent=0 // pred_fallthru
    _

// kernel: decoder_rnn_forward.4
$region0: #{decoder_rnn_forward.4}
  #allocation0 [shape = 'u32[]', space=smem, size = 0x4, offset = 0x4, fixed_abs, tag = 'smem constant byte address 0x4 - core index']
  #allocation1 [shape = 'u32[144,128]{1,0:T(1,128)}', space=vmem, size = 0x12000, scoped, tag = 'internal scratch']
  %s0 = inlined_call_operand.vmem [shape: f32[8,8,512], index: 0, kind: input, shape index: {}]
  %s1 = inlined_call_operand.vmem [shape: f32[128,512], index: 1, kind: input, shape index: {}]
  %s2 = inlined_call_operand.vmem [shape: f32[8,8,128], index: 2, kind: output, shape index: {}]
  %s3 = sld [smem:[#allocation0]]
  $region18: #{decoder_rnn_forward.4} parent=0
    _
  %s5 = ssub.s32 1, %s3
  %s6 = scalar_select 0, %s5, %s3
  // Predicated region
  $region2: #{decoder_rnn_forward.4} parent=0 // pred_check
    _
  $region3: #{decoder_rnn_forward.4} parent=0 // pred_check_branch
    %8 = sbr.rel (0) target = $region5
  $region4: #{decoder_rnn_forward.4} parent=0 // pred_region
    _
  $region5: #{decoder_rnn_forward.4} parent=0 // pred_fallthru
    _
  // Predicated region
  $region6: #{decoder_rnn_forward.4} parent=0 // pred_check
    _
  $region7: #{decoder_rnn_forward.4} parent=0 // pred_check_branch
    %10 = sbr.rel (0) target = $region9
  $region8: #{decoder_rnn_forward.4} parent=0 // pred_region
    _
  $region9: #{decoder_rnn_forward.4} parent=0 // pred_fallthru
    _
  %v11 = vld [vmem:[%s1] sm:$0xff]
  %v12 = vld [vmem:[%s1 + $0x8] sm:$0xff]
  %v13 = vld [vmem:[%s1 + $0x10] sm:$0xff]
  %v14 = vld [vmem:[%s1 + $0x18] sm:$0xff]
  %v15 = vld [vmem:[%s1 + $0x20] sm:$0xff]
  %v16 = vld [vmem:[%s1 + $0x28] sm:$0xff]
  %v17 = vld [vmem:[%s1 + $0x30] sm:$0xff]
  %v18 = vld [vmem:[%s1 + $0x38] sm:$0xff]
  %v19 = vld [vmem:[%s1 + $0x40] sm:$0xff]
  %v20 = vld [vmem:[%s1 + $0x48] sm:$0xff]
  %v21 = vld [vmem:[%s1 + $0x50] sm:$0xff]
  %v22 = vld [vmem:[%s1 + $0x58] sm:$0xff]
  %v23 = vld [vmem:[%s1 + $0x60] sm:$0xff]
  %v24 = vld [vmem:[%s1 + $0x68] sm:$0xff]
  %v25 = vld [vmem:[%s1 + $0x70] sm:$0xff]
  %v26 = vld [vmem:[%s1 + $0x78] sm:$0xff]
  %v27 = vld [vmem:[%s1 + $0x80] sm:$0xff]
  %v28 = vld [vmem:[%s1 + $0x88] sm:$0xff]
  %v29 = vld [vmem:[%s1 + $0x90] sm:$0xff]
  %v30 = vld [vmem:[%s1 + $0x98] sm:$0xff]
  %v31 = vld [vmem:[%s1 + $0xa0] sm:$0xff]
  %v32 = vld [vmem:[%s1 + $0xa8] sm:$0xff]
  %v33 = vld [vmem:[%s1 + $0xb0] sm:$0xff]
  %v34 = vld [vmem:[%s1 + $0xb8] sm:$0xff]
  %v35 = vld [vmem:[%s1 + $0xc0] sm:$0xff]
  %v36 = vld [vmem:[%s1 + $0xc8] sm:$0xff]
  %v37 = vld [vmem:[%s1 + $0xd0] sm:$0xff]
  %v38 = vld [vmem:[%s1 + $0xd8] sm:$0xff]
  %v39 = vld [vmem:[%s1 + $0xe0] sm:$0xff]
  %v40 = vld [vmem:[%s1 + $0xe8] sm:$0xff]
  %v41 = vld [vmem:[%s1 + $0xf0] sm:$0xff]
  %v42 = vld [vmem:[%s1 + $0xf8] sm:$0xff]
  %v43 = vld [vmem:[%s1 + $0x100] sm:$0xff]
  %v44 = vld [vmem:[%s1 + $0x108] sm:$0xff]
  %v45 = vld [vmem:[%s1 + $0x110] sm:$0xff]
  %v46 = vld [vmem:[%s1 + $0x118] sm:$0xff]
  %v47 = vld [vmem:[%s1 + $0x120] sm:$0xff]
  %v48 = vld [vmem:[%s1 + $0x128] sm:$0xff]
  %v49 = vld [vmem:[%s1 + $0x130] sm:$0xff]
  %v50 = vld [vmem:[%s1 + $0x138] sm:$0xff]
  %v51 = vld [vmem:[%s1 + $0x140] sm:$0xff]
  %v52 = vld [vmem:[%s1 + $0x148] sm:$0xff]
  %v53 = vld [vmem:[%s1 + $0x150] sm:$0xff]
  %v54 = vld [vmem:[%s1 + $0x158] sm:$0xff]
  %v55 = vld [vmem:[%s1 + $0x160] sm:$0xff]
  %v56 = vld [vmem:[%s1 + $0x168] sm:$0xff]
  %v57 = vld [vmem:[%s1 + $0x170] sm:$0xff]
  %v58 = vld [vmem:[%s1 + $0x178] sm:$0xff]
  %v59 = vld [vmem:[%s1 + $0x180] sm:$0xff]
  %v60 = vld [vmem:[%s1 + $0x188] sm:$0xff]
  %v61 = vld [vmem:[%s1 + $0x190] sm:$0xff]
  %v62 = vld [vmem:[%s1 + $0x198] sm:$0xff]
  %v63 = vld [vmem:[%s1 + $0x1a0] sm:$0xff]
  %v64 = vld [vmem:[%s1 + $0x1a8] sm:$0xff]
  %v65 = vld [vmem:[%s1 + $0x1b0] sm:$0xff]
  %v66 = vld [vmem:[%s1 + $0x1b8] sm:$0xff]
  %v67 = vld [vmem:[%s1 + $0x1c0] sm:$0xff]
  %v68 = vld [vmem:[%s1 + $0x1c8] sm:$0xff]
  %v69 = vld [vmem:[%s1 + $0x1d0] sm:$0xff]
  %v70 = vld [vmem:[%s1 + $0x1d8] sm:$0xff]
  %v71 = vld [vmem:[%s1 + $0x1e0] sm:$0xff]
  %v72 = vld [vmem:[%s1 + $0x1e8] sm:$0xff]
  %v73 = vld [vmem:[%s1 + $0x1f0] sm:$0xff]
  %v74 = vld [vmem:[%s1 + $0x1f8] sm:$0xff]
  %v75 = vld [vmem:[%s0] sm:$0xff]
  %v76 = vld [vmem:[%s0 + $0x8] sm:$0xff]
  %v77 = vld [vmem:[%s0 + $0x10] sm:$0xff]
  %v78 = vld [vmem:[%s0 + $0x18] sm:$0xff]
  %79 = vmatprep.subr.mxu0 %v12
  %80 = vmatpush1.msra.mxu0 %v11
  %81 = vmatprep.subr.mxu0 %v16
  %82 = vmatpush1.msra.mxu0 %v15
  %83 = vmatprep.subr.mxu0 %v20
  %84 = vmatpush1.msra.mxu0 %v19
  %85 = vmatprep.subr.mxu0 %v24
  %86 = vmatpush1.msra.mxu0 %v23
  %87 = vmatprep.subr.mxu0 %v28
  %88 = vmatpush1.msra.mxu0 %v27
  %89 = vmatprep.subr.mxu0 %v32
  %90 = vmatpush1.msra.mxu0 %v31
  %91 = vmatprep.subr.mxu0 %v36
  %92 = vmatpush1.msra.mxu0 %v35
  %93 = vmatprep.subr.mxu0 %v40
  %94 = vmatpush1.msra.mxu0 %v39
  %95 = vmatprep.subr.mxu0 %v44
  %96 = vmatpush1.msra.mxu0 %v43
  %97 = vmatprep.subr.mxu0 %v48
  %98 = vmatpush1.msra.mxu0 %v47
  %99 = vmatprep.subr.mxu0 %v52
  %100 = vmatpush1.msra.mxu0 %v51
  %101 = vmatprep.subr.mxu0 %v56
  %102 = vmatpush1.msra.mxu0 %v55
  %103 = vmatprep.subr.mxu0 %v60
  %104 = vmatpush1.msra.mxu0 %v59
  %105 = vmatprep.subr.mxu0 %v64
  %106 = vmatpush1.msra.mxu0 %v63
  %107 = vmatprep.subr.mxu0 %v68
  %108 = vmatpush1.msra.mxu0 %v67
  %109 = vmatprep.subr.mxu0 %v72
  %110 = vmatpush1.msra.mxu0 %v71
  %111 = vmatprep.subr.mxu0 0.0
  %112 = vmatpush1.msra.mxu0 0.0
  %113 = vmatprep.subr.mxu0 0.0
  %114 = vmatpush1.msra.mxu0 0.0
  %115 = vmatprep.subr.mxu0 0.0
  %116 = vmatpush1.msra.mxu0 0.0
  %117 = vmatprep.subr.mxu0 0.0
  %118 = vmatpush1.msra.mxu0 0.0
  %119 = vmatprep.subr.mxu0 0.0
  %120 = vmatpush1.msra.mxu0 0.0
  %121 = vmatprep.subr.mxu0 0.0
  %122 = vmatpush1.msra.mxu0 0.0
  %123 = vmatprep.subr.mxu0 0.0
  %124 = vmatpush1.msra.mxu0 0.0
  %125 = vmatprep.subr.mxu0 0.0
  %126 = vmatpush1.msra.mxu0 0.0
  %127 = vmatprep.subr.mxu0 0.0
  %128 = vmatpush1.msra.mxu0 0.0
  %129 = vmatprep.subr.mxu0 0.0
  %130 = vmatpush1.msra.mxu0 0.0
  %131 = vmatprep.subr.mxu0 0.0
  %132 = vmatpush1.msra.mxu0 0.0
  %133 = vmatprep.subr.mxu0 0.0
  %134 = vmatpush1.msra.mxu0 0.0
  %135 = vmatprep.subr.mxu0 0.0
  %136 = vmatpush1.msra.mxu0 0.0
  %137 = vmatprep.subr.mxu0 0.0
  %138 = vmatpush1.msra.mxu0 0.0
  %139 = vmatprep.subr.mxu0 0.0
  %140 = vmatpush1.msra.mxu0 0.0
  %141 = vmatprep.subr.mxu0 0.0
  %142 = vmatpush1.msra.mxu0 0.0
  %143 = vmatprep.mubr.f32.mxu0 0.0
  %144 = vmatmul.mubr.f32.gmra.mrb[0].mxu0 0.0
  %v145 = vpop.f32.mrb[0].mxu0
  %v146 = vadd.f32 0.0, %v145
  %v147 = vpop.f32.mrb[0].mxu0
  %v148 = vadd.f32 0.0, %v147
  %149 = vdwg.mxu0
  %150 = vmatprep.subr.mxu0 %v14
  %151 = vmatpush1.msra.mxu0 %v13
  %152 = vmatprep.subr.mxu0 %v18
  %153 = vmatpush1.msra.mxu0 %v17
  %154 = vmatprep.subr.mxu0 %v22
  %155 = vmatpush1.msra.mxu0 %v21
  %156 = vmatprep.subr.mxu0 %v26
  %157 = vmatpush1.msra.mxu0 %v25
  %158 = vmatprep.subr.mxu0 %v30
  %159 = vmatpush1.msra.mxu0 %v29
  %160 = vmatprep.subr.mxu0 %v34
  %161 = vmatpush1.msra.mxu0 %v33
  %162 = vmatprep.subr.mxu0 %v38
  %163 = vmatpush1.msra.mxu0 %v37
  %164 = vmatprep.subr.mxu0 %v42
  %165 = vmatpush1.msra.mxu0 %v41
  %166 = vmatprep.subr.mxu0 %v46
  %167 = vmatpush1.msra.mxu0 %v45
  %168 = vmatprep.subr.mxu0 %v50
  %169 = vmatpush1.msra.mxu0 %v49
  %170 = vmatprep.subr.mxu0 %v54
  %171 = vmatpush1.msra.mxu0 %v53
  %172 = vmatprep.subr.mxu0 %v58
  %173 = vmatpush1.msra.mxu0 %v57
  %174 = vmatprep.subr.mxu0 %v62
  %175 = vmatpush1.msra.mxu0 %v61
  %176 = vmatprep.subr.mxu0 %v66
  %177 = vmatpush1.msra.mxu0 %v65
  %178 = vmatprep.subr.mxu0 %v70
  %179 = vmatpush1.msra.mxu0 %v69
  %180 = vmatprep.subr.mxu0 %v74
  %181 = vmatpush1.msra.mxu0 %v73
  %182 = vmatprep.subr.mxu0 0.0
  %183 = vmatpush1.msra.mxu0 0.0
  %184 = vmatprep.subr.mxu0 0.0
  %185 = vmatpush1.msra.mxu0 0.0
  %186 = vmatprep.subr.mxu0 0.0
  %187 = vmatpush1.msra.mxu0 0.0
  %188 = vmatprep.subr.mxu0 0.0
  %189 = vmatpush1.msra.mxu0 0.0
  %190 = vmatprep.subr.mxu0 0.0
  %191 = vmatpush1.msra.mxu0 0.0
  %192 = vmatprep.subr.mxu0 0.0
  %193 = vmatpush1.msra.mxu0 0.0
  %194 = vmatprep.subr.mxu0 0.0
  %195 = vmatpush1.msra.mxu0 0.0
  %196 = vmatprep.subr.mxu0 0.0
  %197 = vmatpush1.msra.mxu0 0.0
  %198 = vmatprep.subr.mxu0 0.0
  %199 = vmatpush1.msra.mxu0 0.0
  %200 = vmatprep.subr.mxu0 0.0
  %201 = vmatpush1.msra.mxu0 0.0
  %202 = vmatprep.subr.mxu0 0.0
  %203 = vmatpush1.msra.mxu0 0.0
  %204 = vmatprep.subr.mxu0 0.0
  %205 = vmatpush1.msra.mxu0 0.0
  %206 = vmatprep.subr.mxu0 0.0
  %207 = vmatpush1.msra.mxu0 0.0
  %208 = vmatprep.subr.mxu0 0.0
  %209 = vmatpush1.msra.mxu0 0.0
  %210 = vmatprep.subr.mxu0 0.0
  %211 = vmatpush1.msra.mxu0 0.0
  %212 = vmatprep.subr.mxu0 0.0
  %213 = vmatpush1.msra.mxu0 0.0
  %214 = vmatprep.mubr.f32.mxu0 0.0
  %215 = vmatmul.mubr.f32.gmra.mrb[0].mxu0 0.0
  %v216 = vpop.f32.mrb[0].mxu0
  %v217 = vadd.f32 0.0, %v216
  %v218 = vpop.f32.mrb[0].mxu0
  %v219 = vadd.f32 0.0, %v218
  %220 = vdwg.mxu0
  %v221 = vadd.f32 %v75, %v146
  %v222 = vadd.f32 %v76, %v148
  %v223 = vadd.f32 %v77, %v217
  %v224 = vadd.f32 %v78, %v219
  %v225 = vxor.u32 %v221, 2147483648
  %v226 = vmul.f32 %v225, 1.442695
  %v227 = vpow.pop %v226
  %v228 = vadd.f32 %v227, 1.0
  %v229 = vrcp.pop %v228
  %v230 = vmul.f32 1.0, %v229
  %v231 = vxor.u32 %v222, 2147483648
  %v232 = vmul.f32 %v231, 1.442695
  %v233 = vpow.pop %v232
  %v234 = vadd.f32 %v233, 1.0
  %v235 = vrcp.pop %v234
  %v236 = vmul.f32 1.0, %v235
  %v237 = vtanh.pop %v223
  %v238 = vxor.u32 %v224, 2147483648
  %v239 = vmul.f32 %v238, 1.442695
  %v240 = vpow.pop %v239
  %v241 = vadd.f32 %v240, 1.0
  %v242 = vrcp.pop %v241
  %v243 = vmul.f32 1.0, %v242
  %v244 = vmul.f32 %v236, 0.0
  %v245 = vmul.f32 %v230, %v237
  %v246 = vadd.f32 %v244, %v245
  %v247 = vtanh.pop %v246
  %v248 = vmul.f32 %v243, %v247
  %249 = vst [vmem:[%s2] sm:$0xff] %v248
  %s250 = scalar_lea.vmem %s0, 32
  %v251 = vld [vmem:[%s250] sm:$0xff]
  %v252 = vld [vmem:[%s250 + $0x8] sm:$0xff]
  %v253 = vld [vmem:[%s250 + $0x10] sm:$0xff]
  %v254 = vld [vmem:[%s250 + $0x18] sm:$0xff]
  %255 = vmatprep.subr.mxu0 %v12
  %256 = vmatpush1.msra.mxu0 %v11
  %257 = vmatprep.subr.mxu0 %v16
  %258 = vmatpush1.msra.mxu0 %v15
  %259 = vmatprep.subr.mxu0 %v20
  %260 = vmatpush1.msra.mxu0 %v19
  %261 = vmatprep.subr.mxu0 %v24
  %262 = vmatpush1.msra.mxu0 %v23
  %263 = vmatprep.subr.mxu0 %v28
  %264 = vmatpush1.msra.mxu0 %v27
  %265 = vmatprep.subr.mxu0 %v32
  %266 = vmatpush1.msra.mxu0 %v31
  %267 = vmatprep.subr.mxu0 %v36
  %268 = vmatpush1.msra.mxu0 %v35
  %269 = vmatprep.subr.mxu0 %v40
  %270 = vmatpush1.msra.mxu0 %v39
  %271 = vmatprep.subr.mxu0 %v44
  %272 = vmatpush1.msra.mxu0 %v43
  %273 = vmatprep.subr.mxu0 %v48
  %274 = vmatpush1.msra.mxu0 %v47
  %275 = vmatprep.subr.mxu0 %v52
  %276 = vmatpush1.msra.mxu0 %v51
  %277 = vmatprep.subr.mxu0 %v56
  %278 = vmatpush1.msra.mxu0 %v55
  %279 = vmatprep.subr.mxu0 %v60
  %280 = vmatpush1.msra.mxu0 %v59
  %281 = vmatprep.subr.mxu0 %v64
  %282 = vmatpush1.msra.mxu0 %v63
  %283 = vmatprep.subr.mxu0 %v68
  %284 = vmatpush1.msra.mxu0 %v67
  %285 = vmatprep.subr.mxu0 %v72
  %286 = vmatpush1.msra.mxu0 %v71
  %287 = vmatprep.subr.mxu0 0.0
  %288 = vmatpush1.msra.mxu0 0.0
  %289 = vmatprep.subr.mxu0 0.0
  %290 = vmatpush1.msra.mxu0 0.0
  %291 = vmatprep.subr.mxu0 0.0
  %292 = vmatpush1.msra.mxu0 0.0
  %293 = vmatprep.subr.mxu0 0.0
  %294 = vmatpush1.msra.mxu0 0.0
  %295 = vmatprep.subr.mxu0 0.0
  %296 = vmatpush1.msra.mxu0 0.0
  %297 = vmatprep.subr.mxu0 0.0
  %298 = vmatpush1.msra.mxu0 0.0
  %299 = vmatprep.subr.mxu0 0.0
  %300 = vmatpush1.msra.mxu0 0.0
  %301 = vmatprep.subr.mxu0 0.0
  %302 = vmatpush1.msra.mxu0 0.0
  %303 = vmatprep.subr.mxu0 0.0
  %304 = vmatpush1.msra.mxu0 0.0
  %305 = vmatprep.subr.mxu0 0.0
  %306 = vmatpush1.msra.mxu0 0.0
  %307 = vmatprep.subr.mxu0 0.0
  %308 = vmatpush1.msra.mxu0 0.0
  %309 = vmatprep.subr.mxu0 0.0
  %310 = vmatpush1.msra.mxu0 0.0
  %311 = vmatprep.subr.mxu0 0.0
  %312 = vmatpush1.msra.mxu0 0.0
  %313 = vmatprep.subr.mxu0 0.0
  %314 = vmatpush1.msra.mxu0 0.0
  %315 = vmatprep.subr.mxu0 0.0
  %316 = vmatpush1.msra.mxu0 0.0
  %317 = vmatprep.subr.mxu0 0.0
  %318 = vmatpush1.msra.mxu0 0.0
  %319 = vmatprep.mubr.f32.mxu0 0.0
  %320 = vmatmul.mubr.f32.gmra.mrb[0].mxu0 %v248
  %v321 = vpop.f32.mrb[0].mxu0
  %v322 = vadd.f32 0.0, %v321
  %v323 = vpop.f32.mrb[0].mxu0
  %v324 = vadd.f32 0.0, %v323
  %325 = vdwg.mxu0
  %326 = vmatprep.subr.mxu0 %v14
  %327 = vmatpush1.msra.mxu0 %v13
  %328 = vmatprep.subr.mxu0 %v18
  %329 = vmatpush1.msra.mxu0 %v17
  %330 = vmatprep.subr.mxu0 %v22
  %331 = vmatpush1.msra.mxu0 %v21
  %332 = vmatprep.subr.mxu0 %v26
  %333 = vmatpush1.msra.mxu0 %v25
  %334 = vmatprep.subr.mxu0 %v30
  %335 = vmatpush1.msra.mxu0 %v29
  %336 = vmatprep.subr.mxu0 %v34
  %337 = vmatpush1.msra.mxu0 %v33
  %338 = vmatprep.subr.mxu0 %v38
  %339 = vmatpush1.msra.mxu0 %v37
  %340 = vmatprep.subr.mxu0 %v42
  %341 = vmatpush1.msra.mxu0 %v41
  %342 = vmatprep.subr.mxu0 %v46
  %343 = vmatpush1.msra.mxu0 %v45
  %344 = vmatprep.subr.mxu0 %v50
  %345 = vmatpush1.msra.mxu0 %v49
  %346 = vmatprep.subr.mxu0 %v54
  %347 = vmatpush1.msra.mxu0 %v53
  %348 = vmatprep.subr.mxu0 %v58
  %349 = vmatpush1.msra.mxu0 %v57
  %350 = vmatprep.subr.mxu0 %v62
  %351 = vmatpush1.msra.mxu0 %v61
  %352 = vmatprep.subr.mxu0 %v66
  %353 = vmatpush1.msra.mxu0 %v65
  %354 = vmatprep.subr.mxu0 %v70
  %355 = vmatpush1.msra.mxu0 %v69
  %356 = vmatprep.subr.mxu0 %v74
  %357 = vmatpush1.msra.mxu0 %v73
  %358 = vmatprep.subr.mxu0 0.0
  %359 = vmatpush1.msra.mxu0 0.0
  %360 = vmatprep.subr.mxu0 0.0
  %361 = vmatpush1.msra.mxu0 0.0
  %362 = vmatprep.subr.mxu0 0.0
  %363 = vmatpush1.msra.mxu0 0.0
  %364 = vmatprep.subr.mxu0 0.0
  %365 = vmatpush1.msra.mxu0 0.0
  %366 = vmatprep.subr.mxu0 0.0
  %367 = vmatpush1.msra.mxu0 0.0
  %368 = vmatprep.subr.mxu0 0.0
  %369 = vmatpush1.msra.mxu0 0.0
  %370 = vmatprep.subr.mxu0 0.0
  %371 = vmatpush1.msra.mxu0 0.0
  %372 = vmatprep.subr.mxu0 0.0
  %373 = vmatpush1.msra.mxu0 0.0
  %374 = vmatprep.subr.mxu0 0.0
  %375 = vmatpush1.msra.mxu0 0.0
  %376 = vmatprep.subr.mxu0 0.0
  %377 = vmatpush1.msra.mxu0 0.0
  %378 = vmatprep.subr.mxu0 0.0
  %379 = vmatpush1.msra.mxu0 0.0
  %380 = vmatprep.subr.mxu0 0.0
  %381 = vmatpush1.msra.mxu0 0.0
  %382 = vmatprep.subr.mxu0 0.0
  %383 = vmatpush1.msra.mxu0 0.0
  %384 = vmatprep.subr.mxu0 0.0
  %385 = vmatpush1.msra.mxu0 0.0
  %386 = vmatprep.subr.mxu0 0.0
  %387 = vmatpush1.msra.mxu0 0.0
  %388 = vmatprep.subr.mxu0 0.0
  %389 = vmatpush1.msra.mxu0 0.0
  %390 = vmatprep.mubr.f32.mxu0 0.0
  %391 = vmatmul.mubr.f32.gmra.mrb[0].mxu0 %v248
  %v392 = vpop.f32.mrb[0].mxu0
  %v393 = vadd.f32 0.0, %v392
  %v394 = vpop.f32.mrb[0].mxu0
  %v395 = vadd.f32 0.0, %v394
  %396 = vdwg.mxu0
  %v397 = vadd.f32 %v251, %v322
  %v398 = vadd.f32 %v252, %v324
  %v399 = vadd.f32 %v253, %v393
  %v400 = vadd.f32 %v254, %v395
  %v401 = vxor.u32 %v397, 2147483648
  %v402 = vmul.f32 %v401, 1.442695
  %v403 = vpow.pop %v402
  %v404 = vadd.f32 %v403, 1.0
  %v405 = vrcp.pop %v404
  %v406 = vmul.f32 1.0, %v405
  %v407 = vxor.u32 %v398, 2147483648
  %v408 = vmul.f32 %v407, 1.442695
  %v409 = vpow.pop %v408
  %v410 = vadd.f32 %v409, 1.0
  %v411 = vrcp.pop %v410
  %v412 = vmul.f32 1.0, %v411
  %v413 = vtanh.pop %v399
  %v414 = vxor.u32 %v400, 2147483648
  %v415 = vmul.f32 %v414, 1.442695
  %v416 = vpow.pop %v415
  %v417 = vadd.f32 %v416, 1.0
  %v418 = vrcp.pop %v417
  %v419 = vmul.f32 1.0, %v418
  %v420 = vmul.f32 %v412, %v246
  %v421 = vmul.f32 %v406, %v413
  %v422 = vadd.f32 %v420, %v421
  %v423 = vtanh.pop %v422
  %v424 = vmul.f32 %v419, %v423
  %s425 = scalar_lea.vmem %s2, 8
  %426 = vst [vmem:[%s425] sm:$0xff] %v424
  %s427 = scalar_lea.vmem %s0, 64
  %v428 = vld [vmem:[%s427] sm:$0xff]
  %v429 = vld [vmem:[%s427 + $0x8] sm:$0xff]
  %v430 = vld [vmem:[%s427 + $0x10] sm:$0xff]
  %v431 = vld [vmem:[%s427 + $0x18] sm:$0xff]
  %432 = vmatprep.subr.mxu0 %v12
  %433 = vmatpush1.msra.mxu0 %v11
  %434 = vmatprep.subr.mxu0 %v16
  %435 = vmatpush1.msra.mxu0 %v15
  %436 = vmatprep.subr.mxu0 %v20
  %437 = vmatpush1.msra.mxu0 %v19
  %438 = vmatprep.subr.mxu0 %v24
  %439 = vmatpush1.msra.mxu0 %v23
  %440 = vmatprep.subr.mxu0 %v28
  %441 = vmatpush1.msra.mxu0 %v27
  %442 = vmatprep.subr.mxu0 %v32
  %443 = vmatpush1.msra.mxu0 %v31
  %444 = vmatprep.subr.mxu0 %v36
  %445 = vmatpush1.msra.mxu0 %v35
  %446 = vmatprep.subr.mxu0 %v40
  %447 = vmatpush1.msra.mxu0 %v39
  %448 = vmatprep.subr.mxu0 %v44
  %449 = vmatpush1.msra.mxu0 %v43
  %450 = vmatprep.subr.mxu0 %v48
  %451 = vmatpush1.msra.mxu0 %v47
  %452 = vmatprep.subr.mxu0 %v52
  %453 = vmatpush1.msra.mxu0 %v51
  %454 = vmatprep.subr.mxu0 %v56
  %455 = vmatpush1.msra.mxu0 %v55
  %456 = vmatprep.subr.mxu0 %v60
  %457 = vmatpush1.msra.mxu0 %v59
  %458 = vmatprep.subr.mxu0 %v64
  %459 = vmatpush1.msra.mxu0 %v63
  %460 = vmatprep.subr.mxu0 %v68
  %461 = vmatpush1.msra.mxu0 %v67
  %462 = vmatprep.subr.mxu0 %v72
  %463 = vmatpush1.msra.mxu0 %v71
  %464 = vmatprep.subr.mxu0 0.0
  %465 = vmatpush1.msra.mxu0 0.0
  %466 = vmatprep.subr.mxu0 0.0
  %467 = vmatpush1.msra.mxu0 0.0
  %468 = vmatprep.subr.mxu0 0.0
  %469 = vmatpush1.msra.mxu0 0.0
  %470 = vmatprep.subr.mxu0 0.0
  %471 = vmatpush1.msra.mxu0 0.0
  %472 = vmatprep.subr.mxu0 0.0
  %473 = vmatpush1.msra.mxu0 0.0
  %474 = vmatprep.subr.mxu0 0.0
  %475 = vmatpush1.msra.mxu0 0.0
  %476 = vmatprep.subr.mxu0 0.0
  %477 = vmatpush1.msra.mxu0 0.0
  %478 = vmatprep.subr.mxu0 0.0
  %479 = vmatpush1.msra.mxu0 0.0
  %480 = vmatprep.subr.mxu0 0.0
  %481 = vmatpush1.msra.mxu0 0.0
  %482 = vmatprep.subr.mxu0 0.0
  %483 = vmatpush1.msra.mxu0 0.0
  %484 = vmatprep.subr.mxu0 0.0
  %485 = vmatpush1.msra.mxu0 0.0
  %486 = vmatprep.subr.mxu0 0.0
  %487 = vmatpush1.msra.mxu0 0.0
  %488 = vmatprep.subr.mxu0 0.0
  %489 = vmatpush1.msra.mxu0 0.0
  %490 = vmatprep.subr.mxu0 0.0
  %491 = vmatpush1.msra.mxu0 0.0
  %492 = vmatprep.subr.mxu0 0.0
  %493 = vmatpush1.msra.mxu0 0.0
  %494 = vmatprep.subr.mxu0 0.0
  %495 = vmatpush1.msra.mxu0 0.0
  %496 = vmatprep.mubr.f32.mxu0 0.0
  %497 = vmatmul.mubr.f32.gmra.mrb[0].mxu0 %v424
  %v498 = vpop.f32.mrb[0].mxu0
  %v499 = vadd.f32 0.0, %v498
  %v500 = vpop.f32.mrb[0].mxu0
  %v501 = vadd.f32 0.0, %v500
  %502 = vdwg.mxu0
  %503 = vmatprep.subr.mxu0 %v14
  %504 = vmatpush1.msra.mxu0 %v13
  %505 = vmatprep.subr.mxu0 %v18
  %506 = vmatpush1.msra.mxu0 %v17
  %507 = vmatprep.subr.mxu0 %v22
  %508 = vmatpush1.msra.mxu0 %v21
  %509 = vmatprep.subr.mxu0 %v26
  %510 = vmatpush1.msra.mxu0 %v25
  %511 = vmatprep.subr.mxu0 %v30
  %512 = vmatpush1.msra.mxu0 %v29
  %513 = vmatprep.subr.mxu0 %v34
  %514 = vmatpush1.msra.mxu0 %v33
  %515 = vmatprep.subr.mxu0 %v38
  %516 = vmatpush1.msra.mxu0 %v37
  %517 = vmatprep.subr.mxu0 %v42
  %518 = vmatpush1.msra.mxu0 %v41
  %519 = vmatprep.subr.mxu0 %v46
  %520 = vmatpush1.msra.mxu0 %v45
  %521 = vmatprep.subr.mxu0 %v50
  %522 = vmatpush1.msra.mxu0 %v49
  %523 = vmatprep.subr.mxu0 %v54
  %524 = vmatpush1.msra.mxu0 %v53
  %525 = vmatprep.subr.mxu0 %v58
  %526 = vmatpush1.msra.mxu0 %v57
  %527 = vmatprep.subr.mxu0 %v62
  %528 = vmatpush1.msra.mxu0 %v61
  %529 = vmatprep.subr.mxu0 %v66
  %530 = vmatpush1.msra.mxu0 %v65
  %531 = vmatprep.subr.mxu0 %v70
  %532 = vmatpush1.msra.mxu0 %v69
  %533 = vmatprep.subr.mxu0 %v74
  %534 = vmatpush1.msra.mxu0 %v73
  %535 = vmatprep.subr.mxu0 0.0
  %536 = vmatpush1.msra.mxu0 0.0
  %537 = vmatprep.subr.mxu0 0.0
  %538 = vmatpush1.msra.mxu0 0.0
  %539 = vmatprep.subr.mxu0 0.0
  %540 = vmatpush1.msra.mxu0 0.0
  %541 = vmatprep.subr.mxu0 0.0
  %542 = vmatpush1.msra.mxu0 0.0
  %543 = vmatprep.subr.mxu0 0.0
  %544 = vmatpush1.msra.mxu0 0.0
  %545 = vmatprep.subr.mxu0 0.0
  %546 = vmatpush1.msra.mxu0 0.0
  %547 = vmatprep.subr.mxu0 0.0
  %548 = vmatpush1.msra.mxu0 0.0
  %549 = vmatprep.subr.mxu0 0.0
  %550 = vmatpush1.msra.mxu0 0.0
  %551 = vmatprep.subr.mxu0 0.0
  %552 = vmatpush1.msra.mxu0 0.0
  %553 = vmatprep.subr.mxu0 0.0
  %554 = vmatpush1.msra.mxu0 0.0
  %555 = vmatprep.subr.mxu0 0.0
  %556 = vmatpush1.msra.mxu0 0.0
  %557 = vmatprep.subr.mxu0 0.0
  %558 = vmatpush1.msra.mxu0 0.0
  %559 = vmatprep.subr.mxu0 0.0
  %560 = vmatpush1.msra.mxu0 0.0
  %561 = vmatprep.subr.mxu0 0.0
  %562 = vmatpush1.msra.mxu0 0.0
  %563 = vmatprep.subr.mxu0 0.0
  %564 = vmatpush1.msra.mxu0 0.0
  %565 = vmatprep.subr.mxu0 0.0
  %566 = vmatpush1.msra.mxu0 0.0
  %567 = vmatprep.mubr.f32.mxu0 0.0
  %568 = vmatmul.mubr.f32.gmra.mrb[0].mxu0 %v424
  %v569 = vpop.f32.mrb[0].mxu0
  %v570 = vadd.f32 0.0, %v569
  %v571 = vpop.f32.mrb[0].mxu0
  %v572 = vadd.f32 0.0, %v571
  %573 = vdwg.mxu0
  %v574 = vadd.f32 %v428, %v499
  %v575 = vadd.f32 %v429, %v501
  %v576 = vadd.f32 %v430, %v570
  %v577 = vadd.f32 %v431, %v572
  %v578 = vxor.u32 %v574, 2147483648
  %v579 = vmul.f32 %v578, 1.442695
  %v580 = vpow.pop %v579
  %v581 = vadd.f32 %v580, 1.0
  %v582 = vrcp.pop %v581
  %v583 = vmul.f32 1.0, %v582
  %v584 = vxor.u32 %v575, 2147483648
  %v585 = vmul.f32 %v584, 1.442695
  %v586 = vpow.pop %v585
  %v587 = vadd.f32 %v586, 1.0
  %v588 = vrcp.pop %v587
  %v589 = vmul.f32 1.0, %v588
  %v590 = vtanh.pop %v576
  %v591 = vxor.u32 %v577, 2147483648
  %v592 = vmul.f32 %v591, 1.442695
  %v593 = vpow.pop %v592
  %v594 = vadd.f32 %v593, 1.0
  %v595 = vrcp.pop %v594
  %v596 = vmul.f32 1.0, %v595
  %v597 = vmul.f32 %v589, %v422
  %v598 = vmul.f32 %v583, %v590
  %v599 = vadd.f32 %v597, %v598
  %v600 = vtanh.pop %v599
  %v601 = vmul.f32 %v596, %v600
  %s602 = scalar_lea.vmem %s2, 16
  %603 = vst [vmem:[%s602] sm:$0xff] %v601
  %s604 = scalar_lea.vmem %s0, 96
  %v605 = vld [vmem:[%s604] sm:$0xff]
  %v606 = vld [vmem:[%s604 + $0x8] sm:$0xff]
  %v607 = vld [vmem:[%s604 + $0x10] sm:$0xff]
  %v608 = vld [vmem:[%s604 + $0x18] sm:$0xff]
  %609 = vmatprep.subr.mxu0 %v12
  %610 = vmatpush1.msra.mxu0 %v11
  %611 = vmatprep.subr.mxu0 %v16
  %612 = vmatpush1.msra.mxu0 %v15
  %613 = vmatprep.subr.mxu0 %v20
  %614 = vmatpush1.msra.mxu0 %v19
  %615 = vmatprep.subr.mxu0 %v24
  %616 = vmatpush1.msra.mxu0 %v23
  %617 = vmatprep.subr.mxu0 %v28
  %618 = vmatpush1.msra.mxu0 %v27
  %619 = vmatprep.subr.mxu0 %v32
  %620 = vmatpush1.msra.mxu0 %v31
  %621 = vmatprep.subr.mxu0 %v36
  %622 = vmatpush1.msra.mxu0 %v35
  %623 = vmatprep.subr.mxu0 %v40
  %624 = vmatpush1.msra.mxu0 %v39
  %625 = vmatprep.subr.mxu0 %v44
  %626 = vmatpush1.msra.mxu0 %v43
  %627 = vmatprep.subr.mxu0 %v48
  %628 = vmatpush1.msra.mxu0 %v47
  %629 = vmatprep.subr.mxu0 %v52
  %630 = vmatpush1.msra.mxu0 %v51
  %631 = vmatprep.subr.mxu0 %v56
  %632 = vmatpush1.msra.mxu0 %v55
  %633 = vmatprep.subr.mxu0 %v60
  %634 = vmatpush1.msra.mxu0 %v59
  %635 = vmatprep.subr.mxu0 %v64
  %636 = vmatpush1.msra.mxu0 %v63
  %637 = vmatprep.subr.mxu0 %v68
  %638 = vmatpush1.msra.mxu0 %v67
  %639 = vmatprep.subr.mxu0 %v72
  %640 = vmatpush1.msra.mxu0 %v71
  %641 = vmatprep.subr.mxu0 0.0
  %642 = vmatpush1.msra.mxu0 0.0
  %643 = vmatprep.subr.mxu0 0.0
  %644 = vmatpush1.msra.mxu0 0.0
  %645 = vmatprep.subr.mxu0 0.0
  %646 = vmatpush1.msra.mxu0 0.0
  %647 = vmatprep.subr.mxu0 0.0
  %648 = vmatpush1.msra.mxu0 0.0
  %649 = vmatprep.subr.mxu0 0.0
  %650 = vmatpush1.msra.mxu0 0.0
  %651 = vmatprep.subr.mxu0 0.0
  %652 = vmatpush1.msra.mxu0 0.0
  %653 = vmatprep.subr.mxu0 0.0
  %654 = vmatpush1.msra.mxu0 0.0
  %655 = vmatprep.subr.mxu0 0.0
  %656 = vmatpush1.msra.mxu0 0.0
  %657 = vmatprep.subr.mxu0 0.0
  %658 = vmatpush1.msra.mxu0 0.0
  %659 = vmatprep.subr.mxu0 0.0
  %660 = vmatpush1.msra.mxu0 0.0
  %661 = vmatprep.subr.mxu0 0.0
  %662 = vmatpush1.msra.mxu0 0.0
  %663 = vmatprep.subr.mxu0 0.0
  %664 = vmatpush1.msra.mxu0 0.0
  %665 = vmatprep.subr.mxu0 0.0
  %666 = vmatpush1.msra.mxu0 0.0
  %667 = vmatprep.subr.mxu0 0.0
  %668 = vmatpush1.msra.mxu0 0.0
  %669 = vmatprep.subr.mxu0 0.0
  %670 = vmatpush1.msra.mxu0 0.0
  %671 = vmatprep.subr.mxu0 0.0
  %672 = vmatpush1.msra.mxu0 0.0
  %673 = vmatprep.mubr.f32.mxu0 0.0
  %674 = vmatmul.mubr.f32.gmra.mrb[0].mxu0 %v601
  %v675 = vpop.f32.mrb[0].mxu0
  %v676 = vadd.f32 0.0, %v675
  %v677 = vpop.f32.mrb[0].mxu0
  %v678 = vadd.f32 0.0, %v677
  %679 = vdwg.mxu0
  %680 = vmatprep.subr.mxu0 %v14
  %681 = vmatpush1.msra.mxu0 %v13
  %682 = vmatprep.subr.mxu0 %v18
  %683 = vmatpush1.msra.mxu0 %v17
  %684 = vmatprep.subr.mxu0 %v22
  %685 = vmatpush1.msra.mxu0 %v21
  %686 = vmatprep.subr.mxu0 %v26
  %687 = vmatpush1.msra.mxu0 %v25
  %688 = vmatprep.subr.mxu0 %v30
  %689 = vmatpush1.msra.mxu0 %v29
  %690 = vmatprep.subr.mxu0 %v34
  %691 = vmatpush1.msra.mxu0 %v33
  %692 = vmatprep.subr.mxu0 %v38
  %693 = vmatpush1.msra.mxu0 %v37
  %694 = vmatprep.subr.mxu0 %v42
  %695 = vmatpush1.msra.mxu0 %v41
  %696 = vmatprep.subr.mxu0 %v46
  %697 = vmatpush1.msra.mxu0 %v45
  %698 = vmatprep.subr.mxu0 %v50
  %699 = vmatpush1.msra.mxu0 %v49
  %700 = vmatprep.subr.mxu0 %v54
  %701 = vmatpush1.msra.mxu0 %v53
  %702 = vmatprep.subr.mxu0 %v58
  %703 = vmatpush1.msra.mxu0 %v57
  %704 = vmatprep.subr.mxu0 %v62
  %705 = vmatpush1.msra.mxu0 %v61
  %706 = vmatprep.subr.mxu0 %v66
  %707 = vmatpush1.msra.mxu0 %v65
  %708 = vmatprep.subr.mxu0 %v70
  %709 = vmatpush1.msra.mxu0 %v69
  %710 = vmatprep.subr.mxu0 %v74
  %711 = vmatpush1.msra.mxu0 %v73
  %712 = vmatprep.subr.mxu0 0.0
  %713 = vmatpush1.msra.mxu0 0.0
  %714 = vmatprep.subr.mxu0 0.0
  %715 = vmatpush1.msra.mxu0 0.0
  %716 = vmatprep.subr.mxu0 0.0
  %717 = vmatpush1.msra.mxu0 0.0
  %718 = vmatprep.subr.mxu0 0.0
  %719 = vmatpush1.msra.mxu0 0.0
  %720 = vmatprep.subr.mxu0 0.0
  %721 = vmatpush1.msra.mxu0 0.0
  %722 = vmatprep.subr.mxu0 0.0
  %723 = vmatpush1.msra.mxu0 0.0
  %724 = vmatprep.subr.mxu0 0.0
  %725 = vmatpush1.msra.mxu0 0.0
  %726 = vmatprep.subr.mxu0 0.0
  %727 = vmatpush1.msra.mxu0 0.0
  %728 = vmatprep.subr.mxu0 0.0
  %729 = vmatpush1.msra.mxu0 0.0
  %730 = vmatprep.subr.mxu0 0.0
  %731 = vmatpush1.msra.mxu0 0.0
  %732 = vmatprep.subr.mxu0 0.0
  %733 = vmatpush1.msra.mxu0 0.0
  %734 = vmatprep.subr.mxu0 0.0
  %735 = vmatpush1.msra.mxu0 0.0
  %736 = vmatprep.subr.mxu0 0.0
  %737 = vmatpush1.msra.mxu0 0.0
  %738 = vmatprep.subr.mxu0 0.0
  %739 = vmatpush1.msra.mxu0 0.0
  %740 = vmatprep.subr.mxu0 0.0
  %741 = vmatpush1.msra.mxu0 0.0
  %742 = vmatprep.subr.mxu0 0.0
  %743 = vmatpush1.msra.mxu0 0.0
  %744 = vmatprep.mubr.f32.mxu0 0.0
  %745 = vmatmul.mubr.f32.gmra.mrb[0].mxu0 %v601
  %v746 = vpop.f32.mrb[0].mxu0
  %v747 = vadd.f32 0.0, %v746
  %v748 = vpop.f32.mrb[0].mxu0
  %v749 = vadd.f32 0.0, %v748
  %750 = vdwg.mxu0
  %v751 = vadd.f32 %v605, %v676
  %v752 = vadd.f32 %v606, %v678
  %v753 = vadd.f32 %v607, %v747
  %v754 = vadd.f32 %v608, %v749
  %v755 = vxor.u32 %v751, 2147483648
  %v756 = vmul.f32 %v755, 1.442695
  %v757 = vpow.pop %v756
  %v758 = vadd.f32 %v757, 1.0
  %v759 = vrcp.pop %v758
  %v760 = vmul.f32 1.0, %v759
  %v761 = vxor.u32 %v752, 2147483648
  %v762 = vmul.f32 %v761, 1.442695
  %v763 = vpow.pop %v762
  %v764 = vadd.f32 %v763, 1.0
  %v765 = vrcp.pop %v764
  %v766 = vmul.f32 1.0, %v765
  %v767 = vtanh.pop %v753
  %v768 = vxor.u32 %v754, 2147483648
  %v769 = vmul.f32 %v768, 1.442695
  %v770 = vpow.pop %v769
  %v771 = vadd.f32 %v770, 1.0
  %v772 = vrcp.pop %v771
  %v773 = vmul.f32 1.0, %v772
  %v774 = vmul.f32 %v766, %v599
  %v775 = vmul.f32 %v760, %v767
  %v776 = vadd.f32 %v774, %v775
  %v777 = vtanh.pop %v776
  %v778 = vmul.f32 %v773, %v777
  %s779 = scalar_lea.vmem %s2, 24
  %780 = vst [vmem:[%s779] sm:$0xff] %v778
  %s781 = scalar_lea.vmem %s0, 128
  %v782 = vld [vmem:[%s781] sm:$0xff]
  %v783 = vld [vmem:[%s781 + $0x8] sm:$0xff]
  %v784 = vld [vmem:[%s781 + $0x10] sm:$0xff]
  %v785 = vld [vmem:[%s781 + $0x18] sm:$0xff]
  %786 = vmatprep.subr.mxu0 %v12
  %787 = vmatpush1.msra.mxu0 %v11
  %788 = vmatprep.subr.mxu0 %v16
  %789 = vmatpush1.msra.mxu0 %v15
  %790 = vmatprep.subr.mxu0 %v20
  %791 = vmatpush1.msra.mxu0 %v19
  %792 = vmatprep.subr.mxu0 %v24
  %793 = vmatpush1.msra.mxu0 %v23
  %794 = vmatprep.subr.mxu0 %v28
  %795 = vmatpush1.msra.mxu0 %v27
  %796 = vmatprep.subr.mxu0 %v32
  %797 = vmatpush1.msra.mxu0 %v31
  %798 = vmatprep.subr.mxu0 %v36
  %799 = vmatpush1.msra.mxu0 %v35
  %800 = vmatprep.subr.mxu0 %v40
  %801 = vmatpush1.msra.mxu0 %v39
  %802 = vmatprep.subr.mxu0 %v44
  %803 = vmatpush1.msra.mxu0 %v43
  %804 = vmatprep.subr.mxu0 %v48
  %805 = vmatpush1.msra.mxu0 %v47
  %806 = vmatprep.subr.mxu0 %v52
  %807 = vmatpush1.msra.mxu0 %v51
  %808 = vmatprep.subr.mxu0 %v56
  %809 = vmatpush1.msra.mxu0 %v55
  %810 = vmatprep.subr.mxu0 %v60
  %811 = vmatpush1.msra.mxu0 %v59
  %812 = vmatprep.subr.mxu0 %v64
  %813 = vmatpush1.msra.mxu0 %v63
  %814 = vmatprep.subr.mxu0 %v68
  %815 = vmatpush1.msra.mxu0 %v67
  %816 = vmatprep.subr.mxu0 %v72
  %817 = vmatpush1.msra.mxu0 %v71
  %818 = vmatprep.subr.mxu0 0.0
  %819 = vmatpush1.msra.mxu0 0.0
  %820 = vmatprep.subr.mxu0 0.0
  %821 = vmatpush1.msra.mxu0 0.0
  %822 = vmatprep.subr.mxu0 0.0
  %823 = vmatpush1.msra.mxu0 0.0
  %824 = vmatprep.subr.mxu0 0.0
  %825 = vmatpush1.msra.mxu0 0.0
  %826 = vmatprep.subr.mxu0 0.0
  %827 = vmatpush1.msra.mxu0 0.0
  %828 = vmatprep.subr.mxu0 0.0
  %829 = vmatpush1.msra.mxu0 0.0
  %830 = vmatprep.subr.mxu0 0.0
  %831 = vmatpush1.msra.mxu0 0.0
  %832 = vmatprep.subr.mxu0 0.0
  %833 = vmatpush1.msra.mxu0 0.0
  %834 = vmatprep.subr.mxu0 0.0
  %835 = vmatpush1.msra.mxu0 0.0
  %836 = vmatprep.subr.mxu0 0.0
  %837 = vmatpush1.msra.mxu0 0.0
  %838 = vmatprep.subr.mxu0 0.0
  %839 = vmatpush1.msra.mxu0 0.0
  %840 = vmatprep.subr.mxu0 0.0
  %841 = vmatpush1.msra.mxu0 0.0
  %842 = vmatprep.subr.mxu0 0.0
  %843 = vmatpush1.msra.mxu0 0.0
  %844 = vmatprep.subr.mxu0 0.0
  %845 = vmatpush1.msra.mxu0 0.0
  %846 = vmatprep.subr.mxu0 0.0
  %847 = vmatpush1.msra.mxu0 0.0
  %848 = vmatprep.subr.mxu0 0.0
  %849 = vmatpush1.msra.mxu0 0.0
  %850 = vmatprep.mubr.f32.mxu0 0.0
  %851 = vmatmul.mubr.f32.gmra.mrb[0].mxu0 %v778
  %v852 = vpop.f32.mrb[0].mxu0
  %v853 = vadd.f32 0.0, %v852
  %v854 = vpop.f32.mrb[0].mxu0
  %v855 = vadd.f32 0.0, %v854
  %856 = vdwg.mxu0
  %857 = vmatprep.subr.mxu0 %v14
  %858 = vmatpush1.msra.mxu0 %v13
  %859 = vmatprep.subr.mxu0 %v18
  %860 = vmatpush1.msra.mxu0 %v17
  %861 = vmatprep.subr.mxu0 %v22
  %862 = vmatpush1.msra.mxu0 %v21
  %863 = vmatprep.subr.mxu0 %v26
  %864 = vmatpush1.msra.mxu0 %v25
  %865 = vmatprep.subr.mxu0 %v30
  %866 = vmatpush1.msra.mxu0 %v29
  %867 = vmatprep.subr.mxu0 %v34
  %868 = vmatpush1.msra.mxu0 %v33
  %869 = vmatprep.subr.mxu0 %v38
  %870 = vmatpush1.msra.mxu0 %v37
  %871 = vmatprep.subr.mxu0 %v42
  %872 = vmatpush1.msra.mxu0 %v41
  %873 = vmatprep.subr.mxu0 %v46
  %874 = vmatpush1.msra.mxu0 %v45
  %875 = vmatprep.subr.mxu0 %v50
  %876 = vmatpush1.msra.mxu0 %v49
  %877 = vmatprep.subr.mxu0 %v54
  %878 = vmatpush1.msra.mxu0 %v53
  %879 = vmatprep.subr.mxu0 %v58
  %880 = vmatpush1.msra.mxu0 %v57
  %881 = vmatprep.subr.mxu0 %v62
  %882 = vmatpush1.msra.mxu0 %v61
  %883 = vmatprep.subr.mxu0 %v66
  %884 = vmatpush1.msra.mxu0 %v65
  %885 = vmatprep.subr.mxu0 %v70
  %886 = vmatpush1.msra.mxu0 %v69
  %887 = vmatprep.subr.mxu0 %v74
  %888 = vmatpush1.msra.mxu0 %v73
  %889 = vmatprep.subr.mxu0 0.0
  %890 = vmatpush1.msra.mxu0 0.0
  %891 = vmatprep.subr.mxu0 0.0
  %892 = vmatpush1.msra.mxu0 0.0
  %893 = vmatprep.subr.mxu0 0.0
  %894 = vmatpush1.msra.mxu0 0.0
  %895 = vmatprep.subr.mxu0 0.0
  %896 = vmatpush1.msra.mxu0 0.0
  %897 = vmatprep.subr.mxu0 0.0
  %898 = vmatpush1.msra.mxu0 0.0
  %899 = vmatprep.subr.mxu0 0.0
  %900 = vmatpush1.msra.mxu0 0.0
  %901 = vmatprep.subr.mxu0 0.0
  %902 = vmatpush1.msra.mxu0 0.0
  %903 = vmatprep.subr.mxu0 0.0
  %904 = vmatpush1.msra.mxu0 0.0
  %905 = vmatprep.subr.mxu0 0.0
  %906 = vmatpush1.msra.mxu0 0.0
  %907 = vmatprep.subr.mxu0 0.0
  %908 = vmatpush1.msra.mxu0 0.0
  %909 = vmatprep.subr.mxu0 0.0
  %910 = vmatpush1.msra.mxu0 0.0
  %911 = vmatprep.subr.mxu0 0.0
  %912 = vmatpush1.msra.mxu0 0.0
  %913 = vmatprep.subr.mxu0 0.0
  %914 = vmatpush1.msra.mxu0 0.0
  %915 = vmatprep.subr.mxu0 0.0
  %916 = vmatpush1.msra.mxu0 0.0
  %917 = vmatprep.subr.mxu0 0.0
  %918 = vmatpush1.msra.mxu0 0.0
  %919 = vmatprep.subr.mxu0 0.0
  %920 = vmatpush1.msra.mxu0 0.0
  %921 = vmatprep.mubr.f32.mxu0 0.0
  %922 = vmatmul.mubr.f32.gmra.mrb[0].mxu0 %v778
  %v923 = vpop.f32.mrb[0].mxu0
  %v924 = vadd.f32 0.0, %v923
  %v925 = vpop.f32.mrb[0].mxu0
  %v926 = vadd.f32 0.0, %v925
  %927 = vdwg.mxu0
  %v928 = vadd.f32 %v782, %v853
  %v929 = vadd.f32 %v783, %v855
  %v930 = vadd.f32 %v784, %v924
  %v931 = vadd.f32 %v785, %v926
  %v932 = vxor.u32 %v928, 2147483648
  %v933 = vmul.f32 %v932, 1.442695
  %v934 = vpow.pop %v933
  %v935 = vadd.f32 %v934, 1.0
  %v936 = vrcp.pop %v935
  %v937 = vmul.f32 1.0, %v936
  %v938 = vxor.u32 %v929, 2147483648
  %v939 = vmul.f32 %v938, 1.442695
  %v940 = vpow.pop %v939
  %v941 = vadd.f32 %v940, 1.0
  %v942 = vrcp.pop %v941
  %v943 = vmul.f32 1.0, %v942
  %v944 = vtanh.pop %v930
  %v945 = vxor.u32 %v931, 2147483648
  %v946 = vmul.f32 %v945, 1.442695
  %v947 = vpow.pop %v946
  %v948 = vadd.f32 %v947, 1.0
  %v949 = vrcp.pop %v948
  %v950 = vmul.f32 1.0, %v949
  %v951 = vmul.f32 %v943, %v776
  %v952 = vmul.f32 %v937, %v944
  %v953 = vadd.f32 %v951, %v952
  %v954 = vtanh.pop %v953
  %v955 = vmul.f32 %v950, %v954
  %s956 = scalar_lea.vmem %s2, 32
  %957 = vst [vmem:[%s956] sm:$0xff] %v955
  %s958 = scalar_lea.vmem %s0, 160
  %v959 = vld [vmem:[%s958] sm:$0xff]
  %v960 = vld [vmem:[%s958 + $0x8] sm:$0xff]
  %v961 = vld [vmem:[%s958 + $0x10] sm:$0xff]
  %v962 = vld [vmem:[%s958 + $0x18] sm:$0xff]
  %963 = vmatprep.subr.mxu0 %v12
  %964 = vmatpush1.msra.mxu0 %v11
  %965 = vmatprep.subr.mxu0 %v16
  %966 = vmatpush1.msra.mxu0 %v15
  %967 = vmatprep.subr.mxu0 %v20
  %968 = vmatpush1.msra.mxu0 %v19
  %969 = vmatprep.subr.mxu0 %v24
  %970 = vmatpush1.msra.mxu0 %v23
  %971 = vmatprep.subr.mxu0 %v28
  %972 = vmatpush1.msra.mxu0 %v27
  %973 = vmatprep.subr.mxu0 %v32
  %974 = vmatpush1.msra.mxu0 %v31
  %975 = vmatprep.subr.mxu0 %v36
  %976 = vmatpush1.msra.mxu0 %v35
  %977 = vmatprep.subr.mxu0 %v40
  %978 = vmatpush1.msra.mxu0 %v39
  %979 = vmatprep.subr.mxu0 %v44
  %980 = vmatpush1.msra.mxu0 %v43
  %981 = vmatprep.subr.mxu0 %v48
  %982 = vmatpush1.msra.mxu0 %v47
  %983 = vmatprep.subr.mxu0 %v52
  %984 = vmatpush1.msra.mxu0 %v51
  %985 = vmatprep.subr.mxu0 %v56
  %986 = vmatpush1.msra.mxu0 %v55
  %987 = vmatprep.subr.mxu0 %v60
  %988 = vmatpush1.msra.mxu0 %v59
  %989 = vmatprep.subr.mxu0 %v64
  %990 = vmatpush1.msra.mxu0 %v63
  %991 = vmatprep.subr.mxu0 %v68
  %992 = vmatpush1.msra.mxu0 %v67
  %993 = vmatprep.subr.mxu0 %v72
  %994 = vmatpush1.msra.mxu0 %v71
  %995 = vmatprep.subr.mxu0 0.0
  %996 = vmatpush1.msra.mxu0 0.0
  %997 = vmatprep.subr.mxu0 0.0
  %998 = vmatpush1.msra.mxu0 0.0
  %999 = vmatprep.subr.mxu0 0.0
  %1000 = vmatpush1.msra.mxu0 0.0
  %1001 = vmatprep.subr.mxu0 0.0
  %1002 = vmatpush1.msra.mxu0 0.0
  %1003 = vmatprep.subr.mxu0 0.0
  %1004 = vmatpush1.msra.mxu0 0.0
  %1005 = vmatprep.subr.mxu0 0.0
  %1006 = vmatpush1.msra.mxu0 0.0
  %1007 = vmatprep.subr.mxu0 0.0
  %1008 = vmatpush1.msra.mxu0 0.0
  %1009 = vmatprep.subr.mxu0 0.0
  %1010 = vmatpush1.msra.mxu0 0.0
  %1011 = vmatprep.subr.mxu0 0.0
  %1012 = vmatpush1.msra.mxu0 0.0
  %1013 = vmatprep.subr.mxu0 0.0
  %1014 = vmatpush1.msra.mxu0 0.0
  %1015 = vmatprep.subr.mxu0 0.0
  %1016 = vmatpush1.msra.mxu0 0.0
  %1017 = vmatprep.subr.mxu0 0.0
  %1018 = vmatpush1.msra.mxu0 0.0
  %1019 = vmatprep.subr.mxu0 0.0
  %1020 = vmatpush1.msra.mxu0 0.0
  %1021 = vmatprep.subr.mxu0 0.0
  %1022 = vmatpush1.msra.mxu0 0.0
  %1023 = vmatprep.subr.mxu0 0.0
  %1024 = vmatpush1.msra.mxu0 0.0
  %1025 = vmatprep.subr.mxu0 0.0
  %1026 = vmatpush1.msra.mxu0 0.0
  %1027 = vmatprep.mubr.f32.mxu0 0.0
  %1028 = vmatmul.mubr.f32.gmra.mrb[0].mxu0 %v955
  %v1029 = vpop.f32.mrb[0].mxu0
  %v1030 = vadd.f32 0.0, %v1029
  %v1031 = vpop.f32.mrb[0].mxu0
  %v1032 = vadd.f32 0.0, %v1031
  %1033 = vdwg.mxu0
  %1034 = vmatprep.subr.mxu0 %v14
  %1035 = vmatpush1.msra.mxu0 %v13
  %1036 = vmatprep.subr.mxu0 %v18
  %1037 = vmatpush1.msra.mxu0 %v17
  %1038 = vmatprep.subr.mxu0 %v22
  %1039 = vmatpush1.msra.mxu0 %v21
  %1040 = vmatprep.subr.mxu0 %v26
  %1041 = vmatpush1.msra.mxu0 %v25
  %1042 = vmatprep.subr.mxu0 %v30
  %1043 = vmatpush1.msra.mxu0 %v29
  %1044 = vmatprep.subr.mxu0 %v34
  %1045 = vmatpush1.msra.mxu0 %v33
  %1046 = vmatprep.subr.mxu0 %v38
  %1047 = vmatpush1.msra.mxu0 %v37
  %1048 = vmatprep.subr.mxu0 %v42
  %1049 = vmatpush1.msra.mxu0 %v41
  %1050 = vmatprep.subr.mxu0 %v46
  %1051 = vmatpush1.msra.mxu0 %v45
  %1052 = vmatprep.subr.mxu0 %v50
  %1053 = vmatpush1.msra.mxu0 %v49
  %1054 = vmatprep.subr.mxu0 %v54
  %1055 = vmatpush1.msra.mxu0 %v53
  %1056 = vmatprep.subr.mxu0 %v58
  %1057 = vmatpush1.msra.mxu0 %v57
  %1058 = vmatprep.subr.mxu0 %v62
  %1059 = vmatpush1.msra.mxu0 %v61
  %1060 = vmatprep.subr.mxu0 %v66
  %1061 = vmatpush1.msra.mxu0 %v65
  %1062 = vmatprep.subr.mxu0 %v70
  %1063 = vmatpush1.msra.mxu0 %v69
  %1064 = vmatprep.subr.mxu0 %v74
  %1065 = vmatpush1.msra.mxu0 %v73
  %1066 = vmatprep.subr.mxu0 0.0
  %1067 = vmatpush1.msra.mxu0 0.0
  %1068 = vmatprep.subr.mxu0 0.0
  %1069 = vmatpush1.msra.mxu0 0.0
  %1070 = vmatprep.subr.mxu0 0.0
  %1071 = vmatpush1.msra.mxu0 0.0
  %1072 = vmatprep.subr.mxu0 0.0
  %1073 = vmatpush1.msra.mxu0 0.0
  %1074 = vmatprep.subr.mxu0 0.0
  %1075 = vmatpush1.msra.mxu0 0.0
  %1076 = vmatprep.subr.mxu0 0.0
  %1077 = vmatpush1.msra.mxu0 0.0
  %1078 = vmatprep.subr.mxu0 0.0
  %1079 = vmatpush1.msra.mxu0 0.0
  %1080 = vmatprep.subr.mxu0 0.0
  %1081 = vmatpush1.msra.mxu0 0.0
  %1082 = vmatprep.subr.mxu0 0.0
  %1083 = vmatpush1.msra.mxu0 0.0
  %1084 = vmatprep.subr.mxu0 0.0
  %1085 = vmatpush1.msra.mxu0 0.0
  %1086 = vmatprep.subr.mxu0 0.0
  %1087 = vmatpush1.msra.mxu0 0.0
  %1088 = vmatprep.subr.mxu0 0.0
  %1089 = vmatpush1.msra.mxu0 0.0
  %1090 = vmatprep.subr.mxu0 0.0
  %1091 = vmatpush1.msra.mxu0 0.0
  %1092 = vmatprep.subr.mxu0 0.0
  %1093 = vmatpush1.msra.mxu0 0.0
  %1094 = vmatprep.subr.mxu0 0.0
  %1095 = vmatpush1.msra.mxu0 0.0
  %1096 = vmatprep.subr.mxu0 0.0
  %1097 = vmatpush1.msra.mxu0 0.0
  %1098 = vmatprep.mubr.f32.mxu0 0.0
  %1099 = vmatmul.mubr.f32.gmra.mrb[0].mxu0 %v955
  %v1100 = vpop.f32.mrb[0].mxu0
  %v1101 = vadd.f32 0.0, %v1100
  %v1102 = vpop.f32.mrb[0].mxu0
  %v1103 = vadd.f32 0.0, %v1102
  %1104 = vdwg.mxu0
  %v1105 = vadd.f32 %v959, %v1030
  %v1106 = vadd.f32 %v960, %v1032
  %v1107 = vadd.f32 %v961, %v1101
  %v1108 = vadd.f32 %v962, %v1103
  %v1109 = vxor.u32 %v1105, 2147483648
  %v1110 = vmul.f32 %v1109, 1.442695
  %v1111 = vpow.pop %v1110
  %v1112 = vadd.f32 %v1111, 1.0
  %v1113 = vrcp.pop %v1112
  %v1114 = vmul.f32 1.0, %v1113
  %v1115 = vxor.u32 %v1106, 2147483648
  %v1116 = vmul.f32 %v1115, 1.442695
  %v1117 = vpow.pop %v1116
  %v1118 = vadd.f32 %v1117, 1.0
  %v1119 = vrcp.pop %v1118
  %v1120 = vmul.f32 1.0, %v1119
  %v1121 = vtanh.pop %v1107
  %v1122 = vxor.u32 %v1108, 2147483648
  %v1123 = vmul.f32 %v1122, 1.442695
  %v1124 = vpow.pop %v1123
  %v1125 = vadd.f32 %v1124, 1.0
  %v1126 = vrcp.pop %v1125
  %v1127 = vmul.f32 1.0, %v1126
  %v1128 = vmul.f32 %v1120, %v953
  %v1129 = vmul.f32 %v1114, %v1121
  %v1130 = vadd.f32 %v1128, %v1129
  %v1131 = vtanh.pop %v1130
  %v1132 = vmul.f32 %v1127, %v1131
  %s1133 = scalar_lea.vmem %s2, 40
  %1134 = vst [vmem:[%s1133] sm:$0xff] %v1132
  %s1135 = scalar_lea.vmem %s0, 192
  %v1136 = vld [vmem:[%s1135] sm:$0xff]
  %v1137 = vld [vmem:[%s1135 + $0x8] sm:$0xff]
  %v1138 = vld [vmem:[%s1135 + $0x10] sm:$0xff]
  %v1139 = vld [vmem:[%s1135 + $0x18] sm:$0xff]
  %1140 = vmatprep.subr.mxu0 %v12
  %1141 = vmatpush1.msra.mxu0 %v11
  %1142 = vmatprep.subr.mxu0 %v16
  %1143 = vmatpush1.msra.mxu0 %v15
  %1144 = vmatprep.subr.mxu0 %v20
  %1145 = vmatpush1.msra.mxu0 %v19
  %1146 = vmatprep.subr.mxu0 %v24
  %1147 = vmatpush1.msra.mxu0 %v23
  %1148 = vmatprep.subr.mxu0 %v28
  %1149 = vmatpush1.msra.mxu0 %v27
  %1150 = vmatprep.subr.mxu0 %v32
  %1151 = vmatpush1.msra.mxu0 %v31
  %1152 = vmatprep.subr.mxu0 %v36
  %1153 = vmatpush1.msra.mxu0 %v35
  %1154 = vmatprep.subr.mxu0 %v40
  %1155 = vmatpush1.msra.mxu0 %v39
  %1156 = vmatprep.subr.mxu0 %v44
  %1157 = vmatpush1.msra.mxu0 %v43
  %1158 = vmatprep.subr.mxu0 %v48
  %1159 = vmatpush1.msra.mxu0 %v47
  %1160 = vmatprep.subr.mxu0 %v52
  %1161 = vmatpush1.msra.mxu0 %v51
  %1162 = vmatprep.subr.mxu0 %v56
  %1163 = vmatpush1.msra.mxu0 %v55
  %1164 = vmatprep.subr.mxu0 %v60
  %1165 = vmatpush1.msra.mxu0 %v59
  %1166 = vmatprep.subr.mxu0 %v64
  %1167 = vmatpush1.msra.mxu0 %v63
  %1168 = vmatprep.subr.mxu0 %v68
  %1169 = vmatpush1.msra.mxu0 %v67
  %1170 = vmatprep.subr.mxu0 %v72
  %1171 = vmatpush1.msra.mxu0 %v71
  %1172 = vmatprep.subr.mxu0 0.0
  %1173 = vmatpush1.msra.mxu0 0.0
  %1174 = vmatprep.subr.mxu0 0.0
  %1175 = vmatpush1.msra.mxu0 0.0
  %1176 = vmatprep.subr.mxu0 0.0
  %1177 = vmatpush1.msra.mxu0 0.0
  %1178 = vmatprep.subr.mxu0 0.0
  %1179 = vmatpush1.msra.mxu0 0.0
  %1180 = vmatprep.subr.mxu0 0.0
  %1181 = vmatpush1.msra.mxu0 0.0
  %1182 = vmatprep.subr.mxu0 0.0
  %1183 = vmatpush1.msra.mxu0 0.0
  %1184 = vmatprep.subr.mxu0 0.0
  %1185 = vmatpush1.msra.mxu0 0.0
  %1186 = vmatprep.subr.mxu0 0.0
  %1187 = vmatpush1.msra.mxu0 0.0
  %1188 = vmatprep.subr.mxu0 0.0
  %1189 = vmatpush1.msra.mxu0 0.0
  %1190 = vmatprep.subr.mxu0 0.0
  %1191 = vmatpush1.msra.mxu0 0.0
  %1192 = vmatprep.subr.mxu0 0.0
  %1193 = vmatpush1.msra.mxu0 0.0
  %1194 = vmatprep.subr.mxu0 0.0
  %1195 = vmatpush1.msra.mxu0 0.0
  %1196 = vmatprep.subr.mxu0 0.0
  %1197 = vmatpush1.msra.mxu0 0.0
  %1198 = vmatprep.subr.mxu0 0.0
  %1199 = vmatpush1.msra.mxu0 0.0
  %1200 = vmatprep.subr.mxu0 0.0
  %1201 = vmatpush1.msra.mxu0 0.0
  %1202 = vmatprep.subr.mxu0 0.0
  %1203 = vmatpush1.msra.mxu0 0.0
  %1204 = vmatprep.mubr.f32.mxu0 0.0
  %1205 = vmatmul.mubr.f32.gmra.mrb[0].mxu0 %v1132
  %v1206 = vpop.f32.mrb[0].mxu0
  %v1207 = vadd.f32 0.0, %v1206
  %v1208 = vpop.f32.mrb[0].mxu0
  %v1209 = vadd.f32 0.0, %v1208
  %1210 = vdwg.mxu0
  %1211 = vmatprep.subr.mxu0 %v14
  %1212 = vmatpush1.msra.mxu0 %v13
  %1213 = vmatprep.subr.mxu0 %v18
  %1214 = vmatpush1.msra.mxu0 %v17
  %1215 = vmatprep.subr.mxu0 %v22
  %1216 = vmatpush1.msra.mxu0 %v21
  %1217 = vmatprep.subr.mxu0 %v26
  %1218 = vmatpush1.msra.mxu0 %v25
  %1219 = vmatprep.subr.mxu0 %v30
  %1220 = vmatpush1.msra.mxu0 %v29
  %1221 = vmatprep.subr.mxu0 %v34
  %1222 = vmatpush1.msra.mxu0 %v33
  %1223 = vmatprep.subr.mxu0 %v38
  %1224 = vmatpush1.msra.mxu0 %v37
  %1225 = vmatprep.subr.mxu0 %v42
  %1226 = vmatpush1.msra.mxu0 %v41
  %1227 = vmatprep.subr.mxu0 %v46
  %1228 = vmatpush1.msra.mxu0 %v45
  %1229 = vmatprep.subr.mxu0 %v50
  %1230 = vmatpush1.msra.mxu0 %v49
  %1231 = vmatprep.subr.mxu0 %v54
  %1232 = vmatpush1.msra.mxu0 %v53
  %1233 = vmatprep.subr.mxu0 %v58
  %1234 = vmatpush1.msra.mxu0 %v57
  %1235 = vmatprep.subr.mxu0 %v62
  %1236 = vmatpush1.msra.mxu0 %v61
  %1237 = vmatprep.subr.mxu0 %v66
  %1238 = vmatpush1.msra.mxu0 %v65
  %1239 = vmatprep.subr.mxu0 %v70
  %1240 = vmatpush1.msra.mxu0 %v69
  %1241 = vmatprep.subr.mxu0 %v74
  %1242 = vmatpush1.msra.mxu0 %v73
  %1243 = vmatprep.subr.mxu0 0.0
  %1244 = vmatpush1.msra.mxu0 0.0
  %1245 = vmatprep.subr.mxu0 0.0
  %1246 = vmatpush1.msra.mxu0 0.0
  %1247 = vmatprep.subr.mxu0 0.0
  %1248 = vmatpush1.msra.mxu0 0.0
  %1249 = vmatprep.subr.mxu0 0.0
  %1250 = vmatpush1.msra.mxu0 0.0
  %1251 = vmatprep.subr.mxu0 0.0
  %1252 = vmatpush1.msra.mxu0 0.0
  %1253 = vmatprep.subr.mxu0 0.0
  %1254 = vmatpush1.msra.mxu0 0.0
  %1255 = vmatprep.subr.mxu0 0.0
  %1256 = vmatpush1.msra.mxu0 0.0
  %1257 = vmatprep.subr.mxu0 0.0
  %1258 = vmatpush1.msra.mxu0 0.0
  %1259 = vmatprep.subr.mxu0 0.0
  %1260 = vmatpush1.msra.mxu0 0.0
  %1261 = vmatprep.subr.mxu0 0.0
  %1262 = vmatpush1.msra.mxu0 0.0
  %1263 = vmatprep.subr.mxu0 0.0
  %1264 = vmatpush1.msra.mxu0 0.0
  %1265 = vmatprep.subr.mxu0 0.0
  %1266 = vmatpush1.msra.mxu0 0.0
  %1267 = vmatprep.subr.mxu0 0.0
  %1268 = vmatpush1.msra.mxu0 0.0
  %1269 = vmatprep.subr.mxu0 0.0
  %1270 = vmatpush1.msra.mxu0 0.0
  %1271 = vmatprep.subr.mxu0 0.0
  %1272 = vmatpush1.msra.mxu0 0.0
  %1273 = vmatprep.subr.mxu0 0.0
  %1274 = vmatpush1.msra.mxu0 0.0
  %1275 = vmatprep.mubr.f32.mxu0 0.0
  %1276 = vmatmul.mubr.f32.gmra.mrb[0].mxu0 %v1132
  %v1277 = vpop.f32.mrb[0].mxu0
  %v1278 = vadd.f32 0.0, %v1277
  %v1279 = vpop.f32.mrb[0].mxu0
  %v1280 = vadd.f32 0.0, %v1279
  %1281 = vdwg.mxu0
  %v1282 = vadd.f32 %v1136, %v1207
  %v1283 = vadd.f32 %v1137, %v1209
  %v1284 = vadd.f32 %v1138, %v1278
  %v1285 = vadd.f32 %v1139, %v1280
  %v1286 = vxor.u32 %v1282, 2147483648
  %v1287 = vmul.f32 %v1286, 1.442695
  %v1288 = vpow.pop %v1287
  %v1289 = vadd.f32 %v1288, 1.0
  %v1290 = vrcp.pop %v1289
  %v1291 = vmul.f32 1.0, %v1290
  %v1292 = vxor.u32 %v1283, 2147483648
  %v1293 = vmul.f32 %v1292, 1.442695
  %v1294 = vpow.pop %v1293
  %v1295 = vadd.f32 %v1294, 1.0
  %v1296 = vrcp.pop %v1295
  %v1297 = vmul.f32 1.0, %v1296
  %v1298 = vtanh.pop %v1284
  %v1299 = vxor.u32 %v1285, 2147483648
  %v1300 = vmul.f32 %v1299, 1.442695
  %v1301 = vpow.pop %v1300
  %v1302 = vadd.f32 %v1301, 1.0
  %v1303 = vrcp.pop %v1302
  %v1304 = vmul.f32 1.0, %v1303
  %v1305 = vmul.f32 %v1297, %v1130
  %v1306 = vmul.f32 %v1291, %v1298
  %v1307 = vadd.f32 %v1305, %v1306
  %v1308 = vtanh.pop %v1307
  %v1309 = vmul.f32 %v1304, %v1308
  %s1310 = scalar_lea.vmem %s2, 48
  %1311 = vst [vmem:[%s1310] sm:$0xff] %v1309
  %s1312 = scalar_lea.vmem %s0, 224
  %v1313 = vld [vmem:[%s1312] sm:$0xff]
  %v1314 = vld [vmem:[%s1312 + $0x8] sm:$0xff]
  %v1315 = vld [vmem:[%s1312 + $0x10] sm:$0xff]
  %v1316 = vld [vmem:[%s1312 + $0x18] sm:$0xff]
  %1317 = vmatprep.subr.mxu0 %v12
  %1318 = vmatpush1.msra.mxu0 %v11
  %1319 = vmatprep.subr.mxu0 %v16
  %1320 = vmatpush1.msra.mxu0 %v15
  %1321 = vmatprep.subr.mxu0 %v20
  %1322 = vmatpush1.msra.mxu0 %v19
  %1323 = vmatprep.subr.mxu0 %v24
  %1324 = vmatpush1.msra.mxu0 %v23
  %1325 = vmatprep.subr.mxu0 %v28
  %1326 = vmatpush1.msra.mxu0 %v27
  %1327 = vmatprep.subr.mxu0 %v32
  %1328 = vmatpush1.msra.mxu0 %v31
  %1329 = vmatprep.subr.mxu0 %v36
  %1330 = vmatpush1.msra.mxu0 %v35
  %1331 = vmatprep.subr.mxu0 %v40
  %1332 = vmatpush1.msra.mxu0 %v39
  %1333 = vmatprep.subr.mxu0 %v44
  %1334 = vmatpush1.msra.mxu0 %v43
  %1335 = vmatprep.subr.mxu0 %v48
  %1336 = vmatpush1.msra.mxu0 %v47
  %1337 = vmatprep.subr.mxu0 %v52
  %1338 = vmatpush1.msra.mxu0 %v51
  %1339 = vmatprep.subr.mxu0 %v56
  %1340 = vmatpush1.msra.mxu0 %v55
  %1341 = vmatprep.subr.mxu0 %v60
  %1342 = vmatpush1.msra.mxu0 %v59
  %1343 = vmatprep.subr.mxu0 %v64
  %1344 = vmatpush1.msra.mxu0 %v63
  %1345 = vmatprep.subr.mxu0 %v68
  %1346 = vmatpush1.msra.mxu0 %v67
  %1347 = vmatprep.subr.mxu0 %v72
  %1348 = vmatpush1.msra.mxu0 %v71
  %1349 = vmatprep.subr.mxu0 0.0
  %1350 = vmatpush1.msra.mxu0 0.0
  %1351 = vmatprep.subr.mxu0 0.0
  %1352 = vmatpush1.msra.mxu0 0.0
  %1353 = vmatprep.subr.mxu0 0.0
  %1354 = vmatpush1.msra.mxu0 0.0
  %1355 = vmatprep.subr.mxu0 0.0
  %1356 = vmatpush1.msra.mxu0 0.0
  %1357 = vmatprep.subr.mxu0 0.0
  %1358 = vmatpush1.msra.mxu0 0.0
  %1359 = vmatprep.subr.mxu0 0.0
  %1360 = vmatpush1.msra.mxu0 0.0
  %1361 = vmatprep.subr.mxu0 0.0
  %1362 = vmatpush1.msra.mxu0 0.0
  %1363 = vmatprep.subr.mxu0 0.0
  %1364 = vmatpush1.msra.mxu0 0.0
  %1365 = vmatprep.subr.mxu0 0.0
  %1366 = vmatpush1.msra.mxu0 0.0
  %1367 = vmatprep.subr.mxu0 0.0
  %1368 = vmatpush1.msra.mxu0 0.0
  %1369 = vmatprep.subr.mxu0 0.0
  %1370 = vmatpush1.msra.mxu0 0.0
  %1371 = vmatprep.subr.mxu0 0.0
  %1372 = vmatpush1.msra.mxu0 0.0
  %1373 = vmatprep.subr.mxu0 0.0
  %1374 = vmatpush1.msra.mxu0 0.0
  %1375 = vmatprep.subr.mxu0 0.0
  %1376 = vmatpush1.msra.mxu0 0.0
  %1377 = vmatprep.subr.mxu0 0.0
  %1378 = vmatpush1.msra.mxu0 0.0
  %1379 = vmatprep.subr.mxu0 0.0
  %1380 = vmatpush1.msra.mxu0 0.0
  %1381 = vmatprep.mubr.f32.mxu0 0.0
  %1382 = vmatmul.mubr.f32.gmra.mrb[0].mxu0 %v1309
  %v1383 = vpop.f32.mrb[0].mxu0
  %v1384 = vadd.f32 0.0, %v1383
  %v1385 = vpop.f32.mrb[0].mxu0
  %v1386 = vadd.f32 0.0, %v1385
  %1387 = vdwg.mxu0
  %1388 = vmatprep.subr.mxu0 %v14
  %1389 = vmatpush1.msra.mxu0 %v13
  %1390 = vmatprep.subr.mxu0 %v18
  %1391 = vmatpush1.msra.mxu0 %v17
  %1392 = vmatprep.subr.mxu0 %v22
  %1393 = vmatpush1.msra.mxu0 %v21
  %1394 = vmatprep.subr.mxu0 %v26
  %1395 = vmatpush1.msra.mxu0 %v25
  %1396 = vmatprep.subr.mxu0 %v30
  %1397 = vmatpush1.msra.mxu0 %v29
  %1398 = vmatprep.subr.mxu0 %v34
  %1399 = vmatpush1.msra.mxu0 %v33
  %1400 = vmatprep.subr.mxu0 %v38
  %1401 = vmatpush1.msra.mxu0 %v37
  %1402 = vmatprep.subr.mxu0 %v42
  %1403 = vmatpush1.msra.mxu0 %v41
  %1404 = vmatprep.subr.mxu0 %v46
  %1405 = vmatpush1.msra.mxu0 %v45
  %1406 = vmatprep.subr.mxu0 %v50
  %1407 = vmatpush1.msra.mxu0 %v49
  %1408 = vmatprep.subr.mxu0 %v54
  %1409 = vmatpush1.msra.mxu0 %v53
  %1410 = vmatprep.subr.mxu0 %v58
  %1411 = vmatpush1.msra.mxu0 %v57
  %1412 = vmatprep.subr.mxu0 %v62
  %1413 = vmatpush1.msra.mxu0 %v61
  %1414 = vmatprep.subr.mxu0 %v66
  %1415 = vmatpush1.msra.mxu0 %v65
  %1416 = vmatprep.subr.mxu0 %v70
  %1417 = vmatpush1.msra.mxu0 %v69
  %1418 = vmatprep.subr.mxu0 %v74
  %1419 = vmatpush1.msra.mxu0 %v73
  %1420 = vmatprep.subr.mxu0 0.0
  %1421 = vmatpush1.msra.mxu0 0.0
  %1422 = vmatprep.subr.mxu0 0.0
  %1423 = vmatpush1.msra.mxu0 0.0
  %1424 = vmatprep.subr.mxu0 0.0
  %1425 = vmatpush1.msra.mxu0 0.0
  %1426 = vmatprep.subr.mxu0 0.0
  %1427 = vmatpush1.msra.mxu0 0.0
  %1428 = vmatprep.subr.mxu0 0.0
  %1429 = vmatpush1.msra.mxu0 0.0
  %1430 = vmatprep.subr.mxu0 0.0
  %1431 = vmatpush1.msra.mxu0 0.0
  %1432 = vmatprep.subr.mxu0 0.0
  %1433 = vmatpush1.msra.mxu0 0.0
  %1434 = vmatprep.subr.mxu0 0.0
  %1435 = vmatpush1.msra.mxu0 0.0
  %1436 = vmatprep.subr.mxu0 0.0
  %1437 = vmatpush1.msra.mxu0 0.0
  %1438 = vmatprep.subr.mxu0 0.0
  %1439 = vmatpush1.msra.mxu0 0.0
  %1440 = vmatprep.subr.mxu0 0.0
  %1441 = vmatpush1.msra.mxu0 0.0
  %1442 = vmatprep.subr.mxu0 0.0
  %1443 = vmatpush1.msra.mxu0 0.0
  %1444 = vmatprep.subr.mxu0 0.0
  %1445 = vmatpush1.msra.mxu0 0.0
  %1446 = vmatprep.subr.mxu0 0.0
  %1447 = vmatpush1.msra.mxu0 0.0
  %1448 = vmatprep.subr.mxu0 0.0
  %1449 = vmatpush1.msra.mxu0 0.0
  %1450 = vmatprep.subr.mxu0 0.0
  %1451 = vmatpush1.msra.mxu0 0.0
  %1452 = vmatprep.mubr.f32.mxu0 0.0
  %1453 = vmatmul.mubr.f32.gmra.mrb[0].mxu0 %v1309
  %v1454 = vpop.f32.mrb[0].mxu0
  %v1455 = vadd.f32 0.0, %v1454
  %v1456 = vpop.f32.mrb[0].mxu0
  %v1457 = vadd.f32 0.0, %v1456
  %1458 = vdwg.mxu0
  %v1459 = vadd.f32 %v1313, %v1384
  %v1460 = vadd.f32 %v1314, %v1386
  %v1461 = vadd.f32 %v1315, %v1455
  %v1462 = vadd.f32 %v1316, %v1457
  %v1463 = vxor.u32 %v1459, 2147483648
  %v1464 = vmul.f32 %v1463, 1.442695
  %v1465 = vpow.pop %v1464
  %v1466 = vadd.f32 %v1465, 1.0
  %v1467 = vrcp.pop %v1466
  %v1468 = vmul.f32 1.0, %v1467
  %v1469 = vxor.u32 %v1460, 2147483648
  %v1470 = vmul.f32 %v1469, 1.442695
  %v1471 = vpow.pop %v1470
  %v1472 = vadd.f32 %v1471, 1.0
  %v1473 = vrcp.pop %v1472
  %v1474 = vmul.f32 1.0, %v1473
  %v1475 = vtanh.pop %v1461
  %v1476 = vxor.u32 %v1462, 2147483648
  %v1477 = vmul.f32 %v1476, 1.442695
  %v1478 = vpow.pop %v1477
  %v1479 = vadd.f32 %v1478, 1.0
  %v1480 = vrcp.pop %v1479
  %v1481 = vmul.f32 1.0, %v1480
  %v1482 = vmul.f32 %v1474, %v1307
  %v1483 = vmul.f32 %v1468, %v1475
  %v1484 = vadd.f32 %v1482, %v1483
  %v1485 = vtanh.pop %v1484
  %v1486 = vmul.f32 %v1481, %v1485
  %s1487 = scalar_lea.vmem %s2, 56
  %1488 = vst [vmem:[%s1487] sm:$0xff] %v1486
  // Predicated region
  $region10: #{decoder_rnn_forward.4} parent=0 // pred_check
    _
  $region11: #{decoder_rnn_forward.4} parent=0 // pred_check_branch
    %1490 = sbr.rel (0) target = $region13
  $region12: #{decoder_rnn_forward.4} parent=0 // pred_region
    _
  $region13: #{decoder_rnn_forward.4} parent=0 // pred_fallthru
    _
  // Predicated region
  $region14: #{decoder_rnn_forward.4} parent=0 // pred_check
    _
  $region15: #{decoder_rnn_forward.4} parent=0 // pred_check_branch
    %1492 = sbr.rel (0) target = $region17
  $region16: #{decoder_rnn_forward.4} parent=0 // pred_region
    _
  $region17: #{decoder_rnn_forward.4} parent=0 // pred_fallthru
    _

</llo_original>
